<compile_context>
chip_gen: v7x
topology: tpu7x:2x2x1
jax: 0.10.0
libtpu: 0.0.40
codegen_flags: <defaults>
</compile_context>

<pallas_src>
import jax
import jax.numpy as jnp
from jax.experimental import pallas as pl
from jax.experimental.pallas import tpu as pltpu


# ------------------------------ Pallas kernel ------------------------------ #

def _make_kernel(H, W, C):
    HB = H + 2                         # rows of the intermediate h band (-1..H)

    def kernel(xs_ref, xr_ref, b1_ref, b2_ref,
               s1_ref, t1_ref, s2_ref, t2_ref, rm_ref, o_ref):
        xs = xs_ref[...]               # (H+4, (W+4)*C) bf16, (W, C) lane-packed

        # -------- stage 1: conv1 over 3 row taps (+ folded BN1, ReLU) ------ #
        acc1 = jnp.dot(xs[0:HB, :], b1_ref[0],
                       preferred_element_type=jnp.float32)
        for ky in (1, 2):
            acc1 += jnp.dot(xs[ky:ky + HB, :], b1_ref[ky],
                            preferred_element_type=jnp.float32)
        # BN1 scale/bias are pre-tiled over lanes; lanes of h that are conv2's
        # W zero-padding columns carry 0 scale and 0 bias, so ReLU keeps them 0.
        # rm_ref (H+2, 1) zeroes h rows -1 and H (conv2's H zero padding) with
        # one static multiply -- no iota/compare/select per tile.
        h = (jnp.maximum(acc1 * s1_ref[...] + t1_ref[...], 0.0)
             * rm_ref[...]).astype(jnp.bfloat16)          # (H+2, (W+2)*C)

        # -------- stage 2: conv2 over 3 row taps (+ folded BN2) ------------ #
        acc2 = jnp.dot(h[0:H, :], b2_ref[0],
                       preferred_element_type=jnp.float32)
        for ky in (1, 2):
            acc2 += jnp.dot(h[ky:ky + H, :], b2_ref[ky],
                            preferred_element_type=jnp.float32)

        # -------- folded BN2 + residual add (identity kept in f32) --------- #
        y = acc2 * s2_ref[...] + t2_ref[...] + xr_ref[...]
        o_ref[...] = y.astype(jnp.bfloat16)               # bf16, 128-lane store

    return kernel


def _vmem_limit(est_bytes):
    """Generation-aware VMEM budget: ~25% headroom under the chip's capacity
    (64 MiB/core on v7x, 128 MiB on v5e/v6e), floor at 16 MiB."""
    cap = 64 << 20                     # conservative default (v7x-sized)
    try:
        cap = int(pltpu.get_tpu_info().vmem_capacity_bytes)
    except Exception:
        pass
    return int(min(max(4 * est_bytes, 16 << 20), (cap * 3) // 4))


def conv_block_pallas(xp, xr, B1, B2, s1t, t1t, s2t, t2t, rowmask,
                      *, N, H, W, C):
    WpC = (W + 4) * C                  # input slab lanes
    N1 = (W + 2) * C                   # h-band lanes
    N2 = W * C                         # output lanes (lane-dense: 128 here)

    # per-step VMEM: double-buffered slab / residual / output tile, plus the
    # (constant-index, still default double-buffered) weights and BN vectors.
    slab_b = (H + 4) * WpC * 2
    res_b = H * N2 * 4
    out_b = H * N2 * 2
    wgt_b = (3 * WpC * N1 + 3 * N1 * N2) * 2
    vec_b = (2 * N1 + 2 * N2 + (H + 2)) * 4
    est = 2 * (slab_b + res_b + out_b) + 2 * (wgt_b + vec_b)

    return pl.pallas_call(
        _make_kernel(H, W, C),
        out_shape=jax.ShapeDtypeStruct((N, H, N2), jnp.bfloat16),
        grid=(N,),
        in_specs=[
            pl.BlockSpec((None, H + 4, WpC), lambda n: (n, 0, 0)),  # padded img
            pl.BlockSpec((None, H, N2), lambda n: (n, 0, 0)),       # f32 identity
            pl.BlockSpec((3, WpC, N1), lambda n: (0, 0, 0)),        # B1 (conv1)
            pl.BlockSpec((3, N1, N2), lambda n: (0, 0, 0)),         # B2 (conv2)
            pl.BlockSpec((1, N1), lambda n: (0, 0)),                # BN1 scale
            pl.BlockSpec((1, N1), lambda n: (0, 0)),                # BN1 bias
            pl.BlockSpec((1, N2), lambda n: (0, 0)),                # BN2 scale
            pl.BlockSpec((1, N2), lambda n: (0, 0)),                # BN2 bias
            pl.BlockSpec((H + 2, 1), lambda n: (0, 0)),             # row mask
        ],
        out_specs=pl.BlockSpec((None, H, N2), lambda n: (n, 0, 0)),
        compiler_params=pltpu.CompilerParams(
            dimension_semantics=("parallel",),
            vmem_limit_bytes=_vmem_limit(est)),
    )(xp, xr, B1, B2, s1t, t1t, s2t, t2t, rowmask)


# ------------------------------ wrapper glue ------------------------------- #

def fold_bn(gamma, beta, mean, var, eps=1e-5):
    scale = gamma / jnp.sqrt(var + eps)
    return scale, beta - mean * scale


def _banded(w_ky, w_out):
    """(3, Cin, Cout) kx-tap weights -> ((w_out+2)*Cin, w_out*Cout) band matrix.

    B[(q + kx)*Cin + ci, q*Cout + co] = w_ky[kx, ci, co]
    so a row-slab matmul computes the conv over the W (lane) direction.
    """
    _, cin, cout = w_ky.shape
    w_in = w_out + 2
    q = jnp.arange(w_out)
    B = jnp.zeros((w_in, cin, w_out, cout), w_ky.dtype)
    for kx in range(3):
        B = B.at[q + kx, :, q, :].add(w_ky[kx])
    return B.reshape(w_in * cin, w_out * cout)


def basic_residual_block(x_nchw, p):
    N, C, H, W = x_nchw.shape

    # torch OIHW -> HWIO
    w1 = jnp.transpose(p["w1"], (2, 3, 1, 0))
    w2 = jnp.transpose(p["w2"], (2, 3, 1, 0))
    s1, t1 = fold_bn(p["gamma1"], p["beta1"], p["mean1"], p["var1"])
    s2, t2 = fold_bn(p["gamma2"], p["beta2"], p["mean2"], p["var2"])

    # block-banded per-ky weight matrices (bf16 for the MXU)
    B1 = jnp.stack([_banded(w1[ky], W + 2) for ky in range(3)]).astype(jnp.bfloat16)
    B2 = jnp.stack([_banded(w2[ky], W) for ky in range(3)]).astype(jnp.bfloat16)

    # BN scale/bias tiled over the packed (W, C) lane layout; lanes belonging
    # to conv2's W zero-padding columns of h are zeroed in both scale and bias.
    lane1 = jnp.arange((W + 2) * C)
    keep = (lane1 >= C) & (lane1 < (W + 1) * C)
    s1t = jnp.where(keep, jnp.tile(s1, W + 2), 0.0).reshape(1, -1).astype(jnp.float32)
    t1t = jnp.where(keep, jnp.tile(t1, W + 2), 0.0).reshape(1, -1).astype(jnp.float32)
    s2t = jnp.tile(s2, W).reshape(1, -1).astype(jnp.float32)
    t2t = jnp.tile(t2, W).reshape(1, -1).astype(jnp.float32)

    # static mask zeroing h rows -1 and H (conv2's H zero padding)
    rows = jnp.arange(H + 2)
    rowmask = ((rows >= 1) & (rows <= H)).astype(jnp.float32).reshape(H + 2, 1)

    # NCHW -> NHWC once (unavoidable with an NCHW interface); the whole padded
    # image is one grid step, so the padded input goes straight into the kernel
    # with plain BlockSpecs -- no halo-duplicated slab copy in HBM.
    x_nhwc = jnp.transpose(x_nchw, (0, 2, 3, 1))
    xr = x_nhwc.reshape(N, H, W * C).astype(jnp.float32)      # f32 identity path
    xp = jnp.pad(x_nhwc.astype(jnp.bfloat16),
                 ((0, 0), (2, 2), (2, 2), (0, 0))).reshape(N, H + 4, (W + 4) * C)

    out = conv_block_pallas(xp, xr, B1, B2, s1t, t1t, s2t, t2t, rowmask,
                            N=N, H=H, W=W, C=C)               # (N, H, W*C) bf16
    y = out.reshape(N, H, W, C)
    # final transpose on bf16 data; cast back to the caller's dtype last.
    # NOTE: no ReLU after the residual add -- matches the module spec.
    return jnp.transpose(y, (0, 3, 1, 2)).astype(x_nchw.dtype)


# ------------------------------- reference --------------------------------- #

def reference(x_nchw, p):
    """Pure-JAX f32 reference (eval-mode BN, no ReLU after the residual add)."""
    x = jnp.transpose(x_nchw, (0, 2, 3, 1))

    def conv(h, w_oihw):
        return jax.lax.conv_general_dilated(
            h, jnp.transpose(w_oihw, (2, 3, 1, 0)), (1, 1), "SAME",
            dimension_numbers=("NHWC", "HWIO", "NHWC"))

    s1, b1 = fold_bn(p["gamma1"], p["beta1"], p["mean1"], p["var1"])
    s2, b2 = fold_bn(p["gamma2"], p["beta2"], p["mean2"], p["var2"])
    h = jnp.maximum(conv(x, p["w1"]) * s1 + b1, 0.0)
    y = conv(h, p["w2"]) * s2 + b2 + x
    return jnp.transpose(y, (0, 3, 1, 2))


def init_params(key, c):
    ks = jax.random.split(key, 12)
    return {
        # torch nn.Conv2d weights are OIHW
        "w1": 0.1 * jax.random.normal(ks[0], (c, c, 3, 3), jnp.float32),
        "w2": 0.1 * jax.random.normal(ks[1], (c, c, 3, 3), jnp.float32),
        "gamma1": 1.0 + 0.1 * jax.random.normal(ks[2], (c,), jnp.float32),
        "beta1": 0.1 * jax.random.normal(ks[3], (c,), jnp.float32),
        "mean1": 0.05 * jax.random.normal(ks[4], (c,), jnp.float32),
        "var1": 1.0 + 0.2 * jax.random.uniform(ks[5], (c,), jnp.float32),
        "gamma2": 1.0 + 0.1 * jax.random.normal(ks[6], (c,), jnp.float32),
        "beta2": 0.1 * jax.random.normal(ks[7], (c,), jnp.float32),
        "mean2": 0.05 * jax.random.normal(ks[8], (c,), jnp.float32),
        "var2": 1.0 + 0.2 * jax.random.uniform(ks[9], (c,), jnp.float32),
    }


if __name__ == "__main__":
    key = jax.random.PRNGKey(0)
    k_x, k_p = jax.random.split(key)

    C = 8  # default in_channels of BasicResidualBlock
    x = jax.random.normal(k_x, (2, C, 16, 16), jnp.float32)   # NCHW, like PyTorch
    params = init_params(k_p, C)

    out = jax.jit(basic_residual_block)(x, params)
    out = jax.block_until_ready(out)

    ref = reference(x, params)
    assert out.shape == x.shape and out.dtype == x.dtype
    max_err = float(jnp.max(jnp.abs(out - ref)))
    # bf16 activations/weights/output with f32 accumulation -> loose tolerance
    assert jnp.allclose(out, ref, rtol=5e-2, atol=1e-1), f"mismatch, max err {max_err}"

    print("KERNEL_OK")
</pallas_src>

<mosaic_0001>
module attributes {stable_mosaic.version = 11 : i64} {
  func.func @kernel(%arg0: i32, %arg1: memref<1x20x160xbf16, #tpu.memory_space<vmem>>, %arg2: memref<1x16x128xf32, #tpu.memory_space<vmem>>, %arg3: memref<3x160x144xbf16, #tpu.memory_space<vmem>>, %arg4: memref<3x144x128xbf16, #tpu.memory_space<vmem>>, %arg5: memref<1x144xf32, #tpu.memory_space<vmem>>, %arg6: memref<1x144xf32, #tpu.memory_space<vmem>>, %arg7: memref<1x128xf32, #tpu.memory_space<vmem>>, %arg8: memref<1x128xf32, #tpu.memory_space<vmem>>, %arg9: memref<18x1xf32, #tpu.memory_space<vmem>>, %arg10: memref<1x16x128xbf16, #tpu.memory_space<vmem>>) attributes {dimension_semantics = [#tpu.dimension_semantics<parallel>], iteration_bounds = array<i64: 2>, scalar_prefetch = 0 : i64, scratch_operands = 0 : i64, tpu.core_type = #tpu.core_type<tc>, window_params = [{transform_indices = @transform_0, window_bounds = array<i64: 1, 20, 160>}, {transform_indices = @transform_1, window_bounds = array<i64: 1, 16, 128>}, {pipeline_mode = #tpu.pipeline_mode<synchronous>, transform_indices = @transform_2, window_bounds = array<i64: 3, 160, 144>}, {pipeline_mode = #tpu.pipeline_mode<synchronous>, transform_indices = @transform_3, window_bounds = array<i64: 3, 144, 128>}, {pipeline_mode = #tpu.pipeline_mode<synchronous>, transform_indices = @transform_4, window_bounds = array<i64: 1, 144>}, {pipeline_mode = #tpu.pipeline_mode<synchronous>, transform_indices = @transform_5, window_bounds = array<i64: 1, 144>}, {pipeline_mode = #tpu.pipeline_mode<synchronous>, transform_indices = @transform_6, window_bounds = array<i64: 1, 128>}, {pipeline_mode = #tpu.pipeline_mode<synchronous>, transform_indices = @transform_7, window_bounds = array<i64: 1, 128>}, {pipeline_mode = #tpu.pipeline_mode<synchronous>, transform_indices = @transform_8, window_bounds = array<i64: 18, 1>}, {transform_indices = @transform_9, window_bounds = array<i64: 1, 16, 128>}]} {
    %c0 = arith.constant 0 : index
    %c0_0 = arith.constant 0 : index
    %c0_1 = arith.constant 0 : index
    %0 = vector.load %arg1[%c0, %c0_0, %c0_1] : memref<1x20x160xbf16, #tpu.memory_space<vmem>>, vector<1x20x160xbf16>
    %1 = vector.shape_cast %0 : vector<1x20x160xbf16> to vector<20x160xbf16>
    %2 = vector.extract_strided_slice %1 {offsets = [0, 0], sizes = [18, 160], strides = [1, 1]} : vector<20x160xbf16> to vector<18x160xbf16>
    %c0_2 = arith.constant 0 : index
    %c0_3 = arith.constant 0 : index
    %c0_4 = arith.constant 0 : index
    %3 = vector.load %arg3[%c0_2, %c0_3, %c0_4] : memref<3x160x144xbf16, #tpu.memory_space<vmem>>, vector<1x160x144xbf16>
    %4 = vector.shape_cast %3 : vector<1x160x144xbf16> to vector<160x144xbf16>
    %cst = arith.constant dense<0.000000e+00> : vector<18x144xf32>
    %5 = tpu.matmul %2, %4, %cst {dimension_numbers = #tpu.dot_dimension_numbers<[1], [0], [0], [1], [0, 0, 1, 1], [], []>} : vector<18x160xbf16>, vector<160x144xbf16>, vector<18x144xf32> -> vector<18x144xf32>
    %6 = vector.extract_strided_slice %1 {offsets = [1, 0], sizes = [18, 160], strides = [1, 1]} : vector<20x160xbf16> to vector<18x160xbf16>
    %c1 = arith.constant 1 : index
    %c0_5 = arith.constant 0 : index
    %c0_6 = arith.constant 0 : index
    %7 = vector.load %arg3[%c1, %c0_5, %c0_6] : memref<3x160x144xbf16, #tpu.memory_space<vmem>>, vector<1x160x144xbf16>
    %8 = vector.shape_cast %7 : vector<1x160x144xbf16> to vector<160x144xbf16>
    %cst_7 = arith.constant dense<0.000000e+00> : vector<18x144xf32>
    %9 = tpu.matmul %6, %8, %cst_7 {dimension_numbers = #tpu.dot_dimension_numbers<[1], [0], [0], [1], [0, 0, 1, 1], [], []>} : vector<18x160xbf16>, vector<160x144xbf16>, vector<18x144xf32> -> vector<18x144xf32>
    %10 = arith.addf %5, %9 : vector<18x144xf32>
    %11 = vector.extract_strided_slice %1 {offsets = [2, 0], sizes = [18, 160], strides = [1, 1]} : vector<20x160xbf16> to vector<18x160xbf16>
    %c2 = arith.constant 2 : index
    %c0_8 = arith.constant 0 : index
    %c0_9 = arith.constant 0 : index
    %12 = vector.load %arg3[%c2, %c0_8, %c0_9] : memref<3x160x144xbf16, #tpu.memory_space<vmem>>, vector<1x160x144xbf16>
    %13 = vector.shape_cast %12 : vector<1x160x144xbf16> to vector<160x144xbf16>
    %cst_10 = arith.constant dense<0.000000e+00> : vector<18x144xf32>
    %14 = tpu.matmul %11, %13, %cst_10 {dimension_numbers = #tpu.dot_dimension_numbers<[1], [0], [0], [1], [0, 0, 1, 1], [], []>} : vector<18x160xbf16>, vector<160x144xbf16>, vector<18x144xf32> -> vector<18x144xf32>
    %15 = arith.addf %10, %14 : vector<18x144xf32>
    %c0_11 = arith.constant 0 : index
    %c0_12 = arith.constant 0 : index
    %16 = vector.load %arg5[%c0_11, %c0_12] : memref<1x144xf32, #tpu.memory_space<vmem>>, vector<1x144xf32>
    %17 = vector.broadcast %16 : vector<1x144xf32> to vector<18x144xf32>
    %18 = arith.mulf %15, %17 : vector<18x144xf32>
    %c0_13 = arith.constant 0 : index
    %c0_14 = arith.constant 0 : index
    %19 = vector.load %arg6[%c0_13, %c0_14] : memref<1x144xf32, #tpu.memory_space<vmem>>, vector<1x144xf32>
    %20 = vector.broadcast %19 : vector<1x144xf32> to vector<18x144xf32>
    %21 = arith.addf %18, %20 : vector<18x144xf32>
    %cst_15 = arith.constant 0.000000e+00 : f32
    %22 = vector.broadcast %cst_15 : f32 to vector<18x144xf32>
    %23 = arith.maximumf %21, %22 : vector<18x144xf32>
    %c0_16 = arith.constant 0 : index
    %c0_17 = arith.constant 0 : index
    %24 = vector.load %arg9[%c0_16, %c0_17] : memref<18x1xf32, #tpu.memory_space<vmem>>, vector<18x1xf32>
    %25 = vector.broadcast %24 : vector<18x1xf32> to vector<18x144xf32>
    %26 = arith.mulf %23, %25 : vector<18x144xf32>
    %27 = arith.truncf %26 : vector<18x144xf32> to vector<18x144xbf16>
    %28 = vector.extract_strided_slice %27 {offsets = [0, 0], sizes = [16, 144], strides = [1, 1]} : vector<18x144xbf16> to vector<16x144xbf16>
    %c0_18 = arith.constant 0 : index
    %c0_19 = arith.constant 0 : index
    %c0_20 = arith.constant 0 : index
    %29 = vector.load %arg4[%c0_18, %c0_19, %c0_20] : memref<3x144x128xbf16, #tpu.memory_space<vmem>>, vector<1x144x128xbf16>
    %30 = vector.shape_cast %29 : vector<1x144x128xbf16> to vector<144x128xbf16>
    %cst_21 = arith.constant dense<0.000000e+00> : vector<16x128xf32>
    %31 = tpu.matmul %28, %30, %cst_21 {dimension_numbers = #tpu.dot_dimension_numbers<[1], [0], [0], [1], [0, 0, 1, 1], [], []>} : vector<16x144xbf16>, vector<144x128xbf16>, vector<16x128xf32> -> vector<16x128xf32>
    %32 = vector.extract_strided_slice %27 {offsets = [1, 0], sizes = [16, 144], strides = [1, 1]} : vector<18x144xbf16> to vector<16x144xbf16>
    %c1_22 = arith.constant 1 : index
    %c0_23 = arith.constant 0 : index
    %c0_24 = arith.constant 0 : index
    %33 = vector.load %arg4[%c1_22, %c0_23, %c0_24] : memref<3x144x128xbf16, #tpu.memory_space<vmem>>, vector<1x144x128xbf16>
    %34 = vector.shape_cast %33 : vector<1x144x128xbf16> to vector<144x128xbf16>
    %cst_25 = arith.constant dense<0.000000e+00> : vector<16x128xf32>
    %35 = tpu.matmul %32, %34, %cst_25 {dimension_numbers = #tpu.dot_dimension_numbers<[1], [0], [0], [1], [0, 0, 1, 1], [], []>} : vector<16x144xbf16>, vector<144x128xbf16>, vector<16x128xf32> -> vector<16x128xf32>
    %36 = arith.addf %31, %35 : vector<16x128xf32>
    %37 = vector.extract_strided_slice %27 {offsets = [2, 0], sizes = [16, 144], strides = [1, 1]} : vector<18x144xbf16> to vector<16x144xbf16>
    %c2_26 = arith.constant 2 : index
    %c0_27 = arith.constant 0 : index
    %c0_28 = arith.constant 0 : index
    %38 = vector.load %arg4[%c2_26, %c0_27, %c0_28] : memref<3x144x128xbf16, #tpu.memory_space<vmem>>, vector<1x144x128xbf16>
    %39 = vector.shape_cast %38 : vector<1x144x128xbf16> to vector<144x128xbf16>
    %cst_29 = arith.constant dense<0.000000e+00> : vector<16x128xf32>
    %40 = tpu.matmul %37, %39, %cst_29 {dimension_numbers = #tpu.dot_dimension_numbers<[1], [0], [0], [1], [0, 0, 1, 1], [], []>} : vector<16x144xbf16>, vector<144x128xbf16>, vector<16x128xf32> -> vector<16x128xf32>
    %41 = arith.addf %36, %40 : vector<16x128xf32>
    %c0_30 = arith.constant 0 : index
    %c0_31 = arith.constant 0 : index
    %42 = vector.load %arg7[%c0_30, %c0_31] : memref<1x128xf32, #tpu.memory_space<vmem>>, vector<1x128xf32>
    %43 = vector.broadcast %42 : vector<1x128xf32> to vector<16x128xf32>
    %44 = arith.mulf %41, %43 : vector<16x128xf32>
    %c0_32 = arith.constant 0 : index
    %c0_33 = arith.constant 0 : index
    %45 = vector.load %arg8[%c0_32, %c0_33] : memref<1x128xf32, #tpu.memory_space<vmem>>, vector<1x128xf32>
    %46 = vector.broadcast %45 : vector<1x128xf32> to vector<16x128xf32>
    %47 = arith.addf %44, %46 : vector<16x128xf32>
    %c0_34 = arith.constant 0 : index
    %c0_35 = arith.constant 0 : index
    %c0_36 = arith.constant 0 : index
    %48 = vector.load %arg2[%c0_34, %c0_35, %c0_36] : memref<1x16x128xf32, #tpu.memory_space<vmem>>, vector<1x16x128xf32>
    %49 = vector.shape_cast %48 : vector<1x16x128xf32> to vector<16x128xf32>
    %50 = arith.addf %47, %49 : vector<16x128xf32>
    %51 = arith.truncf %50 : vector<16x128xf32> to vector<16x128xbf16>
    %c0_37 = arith.constant 0 : index
    %c0_38 = arith.constant 0 : index
    %c0_39 = arith.constant 0 : index
    %52 = vector.load %arg10[%c0_37, %c0_38, %c0_39] : memref<1x16x128xbf16, #tpu.memory_space<vmem>>, vector<1x16x128xbf16>
    %53 = vector.shape_cast %52 : vector<1x16x128xbf16> to vector<16x128xbf16>
    %54 = vector.shape_cast %51 : vector<16x128xbf16> to vector<1x16x128xbf16>
    tpu.vector_store %arg10[%c0_37, %c0_38, %c0_39], %54 {strides = array<i32>} : memref<1x16x128xbf16, #tpu.memory_space<vmem>>, vector<1x16x128xbf16>,
    return
  }
  func.func @transform_0(%arg0: i32) -> (i32, i32, i32) {
    %c0_i32 = arith.constant 0 : i32
    %c0_i32_0 = arith.constant 0 : i32
    %c0_i32_1 = arith.constant 0 : i32
    return %arg0, %c0_i32, %c0_i32_0 : i32, i32, i32
  }
  func.func @transform_1(%arg0: i32) -> (i32, i32, i32) {
    %c0_i32 = arith.constant 0 : i32
    %c0_i32_0 = arith.constant 0 : i32
    %c0_i32_1 = arith.constant 0 : i32
    return %arg0, %c0_i32, %c0_i32_0 : i32, i32, i32
  }
  func.func @transform_2(%arg0: i32) -> (i32, i32, i32) {
    %c0_i32 = arith.constant 0 : i32
    %c0_i32_0 = arith.constant 0 : i32
    %c0_i32_1 = arith.constant 0 : i32
    %c0_i32_2 = arith.constant 0 : i32
    return %c0_i32, %c0_i32_0, %c0_i32_1 : i32, i32, i32
  }
  func.func @transform_3(%arg0: i32) -> (i32, i32, i32) {
    %c0_i32 = arith.constant 0 : i32
    %c0_i32_0 = arith.constant 0 : i32
    %c0_i32_1 = arith.constant 0 : i32
    %c0_i32_2 = arith.constant 0 : i32
    return %c0_i32, %c0_i32_0, %c0_i32_1 : i32, i32, i32
  }
  func.func @transform_4(%arg0: i32) -> (i32, i32) {
    %c0_i32 = arith.constant 0 : i32
    %c0_i32_0 = arith.constant 0 : i32
    %c0_i32_1 = arith.constant 0 : i32
    return %c0_i32, %c0_i32_0 : i32, i32
  }
  func.func @transform_5(%arg0: i32) -> (i32, i32) {
    %c0_i32 = arith.constant 0 : i32
    %c0_i32_0 = arith.constant 0 : i32
    %c0_i32_1 = arith.constant 0 : i32
    return %c0_i32, %c0_i32_0 : i32, i32
  }
  func.func @transform_6(%arg0: i32) -> (i32, i32) {
    %c0_i32 = arith.constant 0 : i32
    %c0_i32_0 = arith.constant 0 : i32
    %c0_i32_1 = arith.constant 0 : i32
    return %c0_i32, %c0_i32_0 : i32, i32
  }
  func.func @transform_7(%arg0: i32) -> (i32, i32) {
    %c0_i32 = arith.constant 0 : i32
    %c0_i32_0 = arith.constant 0 : i32
    %c0_i32_1 = arith.constant 0 : i32
    return %c0_i32, %c0_i32_0 : i32, i32
  }
  func.func @transform_8(%arg0: i32) -> (i32, i32) {
    %c0_i32 = arith.constant 0 : i32
    %c0_i32_0 = arith.constant 0 : i32
    %c0_i32_1 = arith.constant 0 : i32
    return %c0_i32, %c0_i32_0 : i32, i32
  }
  func.func @transform_9(%arg0: i32) -> (i32, i32, i32) {
    %c0_i32 = arith.constant 0 : i32
    %c0_i32_0 = arith.constant 0 : i32
    %c0_i32_1 = arith.constant 0 : i32
    return %arg0, %c0_i32, %c0_i32_0 : i32, i32, i32
  }
}

</mosaic_0001>

<llo_original>
// kernel: tile.23
$region0: #{tile.23}
  #allocation0 [shape = 's32[1]{0}', space=sflag, size = 0x4, scoped, tag = 'scoped memory for tile.23']
  %s0 = inlined_call_operand.vmem [shape: f32[8], index: 0, kind: input, shape index: {}]
  %s1 = inlined_call_operand.vmem [shape: f32[18,8], index: 1, kind: output, shape index: {}]
  // Predicated region
  $region2: #{tile.23} parent=0 // pred_check
    _
  $region3: #{tile.23} parent=0 // pred_check_branch
    %3 = sbr.rel (0) target = $region5
  $region4: #{tile.23} parent=0 // pred_region
    _
  $region5: #{tile.23} parent=0 // pred_fallthru
    _
  %v4 = vld [vmem:[%s0] ss:$0 sm:$0xff]
  %5 = vst [vmem:[%s1] sm:$0xff] %v4
  %s6 = scalar_lea.vmem %s1, 8
  %7 = vst [vmem:[%s6] sm:$0xff] %v4
  %s8 = scalar_lea.vmem %s1, 16
  %9 = vst [vmem:[%s8] sm:$0xff] %v4

// kernel: tile.33
$region0: #{tile.33}
  #allocation0 [shape = 's32[1]{0}', space=sflag, size = 0x4, scoped, tag = 'scoped memory for tile.33']
  %s0 = inlined_call_operand.vmem [shape: f32[8], index: 0, kind: input, shape index: {}]
  %s1 = inlined_call_operand.vmem [shape: f32[16,8], index: 1, kind: output, shape index: {}]
  // Predicated region
  $region2: #{tile.33} parent=0 // pred_check
    _
  $region3: #{tile.33} parent=0 // pred_check_branch
    %3 = sbr.rel (0) target = $region5
  $region4: #{tile.33} parent=0 // pred_region
    _
  $region5: #{tile.33} parent=0 // pred_fallthru
    _
  %v4 = vld [vmem:[%s0] ss:$0 sm:$0xff]
  %5 = vst [vmem:[%s1] sm:$0xff] %v4
  %s6 = scalar_lea.vmem %s1, 8
  %7 = vst [vmem:[%s6] sm:$0xff] %v4

// kernel: tile.34
$region0: #{tile.34}
  %s0 = inlined_call_operand.vmem [shape: f32[16,8], index: 0, kind: input, shape index: {}]
  %s1 = inlined_call_operand.vmem [shape: f32[1,128], index: 1, kind: output, shape index: {}]
  $region1: #{tile.34} parent=0
    #allocation0 [shape = 'u8[4096]{0}', space=vmem, size = 0x1000, scoped, tag = 'scoped mem for output reshape']
    %v2 = vld [vmem:[%s0] sm:$0x1]
    %vm3 = vcmask 64512
    %4 = vst.msk [vmem:[#allocation0] sm:$0x1] %vm3, %v2
    %s5 = scalar_lea.vmem %s0, 15
    %v6 = vld [vmem:[%s5] sm:$0x1]
    %7 = vrot.lane.b32.xlu0 %v6, 120
    %v8 = vpop.permute.xlu0 %7
    %vm9 = vcmask 1048512
    %10 = vst.msk [vmem:[#allocation0] sm:$0x1] %vm9, %v8
    %s11 = scalar_lea.vmem %s0, 14
    %v12 = vld [vmem:[%s11] sm:$0x1]
    %13 = vrot.lane.b32.xlu0 %v12, 112
    %v14 = vpop.permute.xlu0 %13
    %vm15 = vcmask 982912
    %16 = vst.msk [vmem:[#allocation0] sm:$0x1] %vm15, %v14
    %s17 = scalar_lea.vmem %s0, 13
    %v18 = vld [vmem:[%s17] sm:$0x1]
    %19 = vrot.lane.b32.xlu0 %v18, 104
    %v20 = vpop.permute.xlu0 %19
    %vm21 = vcmask 917312
    %22 = vst.msk [vmem:[#allocation0] sm:$0x1] %vm21, %v20
    %s23 = scalar_lea.vmem %s0, 12
    %v24 = vld [vmem:[%s23] sm:$0x1]
    %25 = vrot.lane.b32.xlu0 %v24, 96
    %v26 = vpop.permute.xlu0 %25
    %vm27 = vcmask 851712
    %28 = vst.msk [vmem:[#allocation0] sm:$0x1] %vm27, %v26
    %s29 = scalar_lea.vmem %s0, 11
    %v30 = vld [vmem:[%s29] sm:$0x1]
    %31 = vrot.lane.b32.xlu0 %v30, 88
    %v32 = vpop.permute.xlu0 %31
    %vm33 = vcmask 786112
    %34 = vst.msk [vmem:[#allocation0] sm:$0x1] %vm33, %v32
    %s35 = scalar_lea.vmem %s0, 10
    %v36 = vld [vmem:[%s35] sm:$0x1]
    %37 = vrot.lane.b32.xlu0 %v36, 80
    %v38 = vpop.permute.xlu0 %37
    %vm39 = vcmask 720512
    %40 = vst.msk [vmem:[#allocation0] sm:$0x1] %vm39, %v38
    %s41 = scalar_lea.vmem %s0, 9
    %v42 = vld [vmem:[%s41] sm:$0x1]
    %43 = vrot.lane.b32.xlu0 %v42, 72
    %v44 = vpop.permute.xlu0 %43
    %vm45 = vcmask 654912
    %46 = vst.msk [vmem:[#allocation0] sm:$0x1] %vm45, %v44
    %s47 = scalar_lea.vmem %s0, 8
    %v48 = vld [vmem:[%s47] sm:$0x1]
    %49 = vrot.lane.b32.xlu0 %v48, 64
    %v50 = vpop.permute.xlu0 %49
    %vm51 = vcmask 589312
    %52 = vst.msk [vmem:[#allocation0] sm:$0x1] %vm51, %v50
    %s53 = scalar_lea.vmem %s0, 7
    %v54 = vld [vmem:[%s53] sm:$0x1]
    %55 = vrot.lane.b32.xlu0 %v54, 56
    %v56 = vpop.permute.xlu0 %55
    %vm57 = vcmask 523712
    %58 = vst.msk [vmem:[#allocation0] sm:$0x1] %vm57, %v56
    %s59 = scalar_lea.vmem %s0, 6
    %v60 = vld [vmem:[%s59] sm:$0x1]
    %61 = vrot.lane.b32.xlu0 %v60, 48
    %v62 = vpop.permute.xlu0 %61
    %vm63 = vcmask 458112
    %64 = vst.msk [vmem:[#allocation0] sm:$0x1] %vm63, %v62
    %s65 = scalar_lea.vmem %s0, 5
    %v66 = vld [vmem:[%s65] sm:$0x1]
    %67 = vrot.lane.b32.xlu0 %v66, 40
    %v68 = vpop.permute.xlu0 %67
    %vm69 = vcmask 392512
    %70 = vst.msk [vmem:[#allocation0] sm:$0x1] %vm69, %v68
    %s71 = scalar_lea.vmem %s0, 4
    %v72 = vld [vmem:[%s71] sm:$0x1]
    %73 = vrot.lane.b32.xlu0 %v72, 32
    %v74 = vpop.permute.xlu0 %73
    %vm75 = vcmask 326912
    %76 = vst.msk [vmem:[#allocation0] sm:$0x1] %vm75, %v74
    %s77 = scalar_lea.vmem %s0, 3
    %v78 = vld [vmem:[%s77] sm:$0x1]
    %79 = vrot.lane.b32.xlu0 %v78, 24
    %v80 = vpop.permute.xlu0 %79
    %vm81 = vcmask 261312
    %82 = vst.msk [vmem:[#allocation0] sm:$0x1] %vm81, %v80
    %s83 = scalar_lea.vmem %s0, 2
    %v84 = vld [vmem:[%s83] sm:$0x1]
    %85 = vrot.lane.b32.xlu0 %v84, 16
    %v86 = vpop.permute.xlu0 %85
    %vm87 = vcmask 195712
    %88 = vst.msk [vmem:[#allocation0] sm:$0x1] %vm87, %v86
    %s89 = scalar_lea.vmem %s0, 1
    %v90 = vld [vmem:[%s89] sm:$0x1]
    %91 = vrot.lane.b32.xlu0 %v90, 8
    %v92 = vpop.permute.xlu0 %91
    %vm93 = vcmask 130112
    %94 = vst.msk [vmem:[#allocation0] sm:$0x1] %vm93, %v92
    %s96 = sshllo.u32 0, 1
    %v98 = vld [vmem:[#allocation0] sm:%s96]
    %s99 = sshllo.u32 0, 1
    %100 = vst [vmem:[%s1] sm:%s99] %v98

// kernel: basic_residual_block.1
$region0: #{basic_residual_block.1}
  #allocation0 [shape = 'u32[]', space=smem, size = 0x4, offset = 0x4, fixed_abs, tag = 'smem constant byte address 0x4 - core index']
  #allocation1 [shape = 'u32[144,128]{1,0:T(1,128)}', space=vmem, size = 0x12000, scoped, tag = 'internal scratch']
  %s0 = inlined_call_operand.vmem [shape: bf16[2,20,160], index: 0, kind: input, shape index: {}]
  %s1 = inlined_call_operand.vmem [shape: f32[2,16,128], index: 1, kind: input, shape index: {}]
  %s2 = inlined_call_operand.vmem [shape: bf16[3,160,144], index: 2, kind: input, shape index: {}]
  %s3 = inlined_call_operand.vmem [shape: bf16[3,144,128], index: 3, kind: input, shape index: {}]
  %s4 = inlined_call_operand.vmem [shape: f32[1,144], index: 4, kind: input, shape index: {}]
  %s5 = inlined_call_operand.vmem [shape: f32[1,144], index: 5, kind: input, shape index: {}]
  %s6 = inlined_call_operand.vmem [shape: f32[1,128], index: 6, kind: input, shape index: {}]
  %s7 = inlined_call_operand.vmem [shape: f32[1,128], index: 7, kind: input, shape index: {}]
  %s8 = inlined_call_operand.vmem [shape: f32[18,1], index: 8, kind: input, shape index: {}]
  %s9 = inlined_call_operand.vmem [shape: bf16[2,16,128], index: 9, kind: output, shape index: {}]
  %s10 = sld [smem:[#allocation0]]
  $region69: #{basic_residual_block.1} parent=0
    _
  %s12 = ssub.s32 1, %s10
  %s13 = scalar_select 0, %s12, %s10
  loop: start=0, step=1, limit=4
  $region2: #{basic_residual_block.1} parent=0 // loop_pre_header
    _
  $region3: #{basic_residual_block.1} parent=0 // loop_header
    %s15 = sphi 0, %s19
    %p16 = scmp.ge.s32.totalorder %s15, 4
    %s25 = sphi 0, %s27
    %s28 = sphi 0, %s25
    %s29 = sphi 0, %s28
    %s45 = sphi 0, %s29
    %s51 = sphi 0, %s53
    %s54 = sphi 0, %s51
    %s55 = sphi 0, %s54
    %s71 = sphi 0, %s55
    %s75 = sphi 0, %s75
    %s77 = sphi 0, %s75
    %s78 = sphi 0, %s77
    %s92 = sphi 0, %s78
    %s96 = sphi 0, %s96
    %s98 = sphi 0, %s96
    %s99 = sphi 0, %s98
    %s113 = sphi 0, %s99
    %s117 = sphi 0, %s117
    %s119 = sphi 0, %s117
    %s120 = sphi 0, %s119
    %s134 = sphi 0, %s120
    %s138 = sphi 0, %s138
    %s140 = sphi 0, %s138
    %s141 = sphi 0, %s140
    %s155 = sphi 0, %s141
    %s159 = sphi 0, %s159
    %s161 = sphi 0, %s159
    %s162 = sphi 0, %s161
    %s176 = sphi 0, %s162
    %s180 = sphi 0, %s180
    %s182 = sphi 0, %s180
    %s183 = sphi 0, %s182
    %s197 = sphi 0, %s183
    %s201 = sphi 0, %s201
    %s203 = sphi 0, %s201
    %s204 = sphi 0, %s203
    %s218 = sphi 0, %s204
    %s224 = sphi 0, %s226
    %s227 = sphi 0, %s224
    %s228 = sphi 0, %s227
    %s244 = sphi 0, %s228
  $region4: #{basic_residual_block.1} parent=0 // loop_header_branch
    %18 = sbr.rel (%p16) target = $region8
  $region5: #{basic_residual_block.1} parent=0 // loop_body
    %s20 = ssub.s32 %s15, 1
    %s21 = ssub.s32 %s15, 2
    %s22 = sadd.s32 %s15, 1
    %s23 = ssub.s32 %s15, %s22
    %p24 = scmp.eq.s32.totalorder %s23, 0
    %s26 = sadd.s32 %s25, 1
    %s27 = scalar_select %p24, %s25, %s26
    %p30 = pneg %p24
    %p31 = scmp.eq.s32.totalorder %s15, 1
    %p32 = por %p30, %p31
    %p33 = scmp.ne.s32.totalorder %s25, %s28
    %p34 = scmp.eq.s32.totalorder %s15, 0
    %p35 = por %p33, %p34
    %p36 = scmp.ne.s32.totalorder %s25, %s28
    %p37 = scmp.eq.s32.totalorder %s20, 1
    %p38 = por %p36, %p37
    %p39 = scmp.ne.s32.totalorder %s28, %s29
    %p40 = scmp.eq.s32.totalorder %s20, 0
    %p41 = por %p39, %p40
    %p42 = scmp.ne.s32.totalorder %s28, %s29
    %p43 = scmp.eq.s32.totalorder %s21, 1
    %p44 = por %p42, %p43
    %p46 = scmp.ne.s32.totalorder %s29, %s45
    %p47 = scmp.eq.s32.totalorder %s21, 0
    %p48 = por %p46, %p47
    %s49 = ssub.s32 %s15, %s22
    %p50 = scmp.eq.s32.totalorder %s49, 0
    %s52 = sadd.s32 %s51, 1
    %s53 = scalar_select %p50, %s51, %s52
    %p56 = pneg %p50
    %p57 = scmp.eq.s32.totalorder %s15, 1
    %p58 = por %p56, %p57
    %p59 = scmp.ne.s32.totalorder %s51, %s54
    %p60 = scmp.eq.s32.totalorder %s15, 0
    %p61 = por %p59, %p60
    %p62 = scmp.ne.s32.totalorder %s51, %s54
    %p63 = scmp.eq.s32.totalorder %s20, 1
    %p64 = por %p62, %p63
    %p65 = scmp.ne.s32.totalorder %s54, %s55
    %p66 = scmp.eq.s32.totalorder %s20, 0
    %p67 = por %p65, %p66
    %p68 = scmp.ne.s32.totalorder %s54, %s55
    %p69 = scmp.eq.s32.totalorder %s21, 1
    %p70 = por %p68, %p69
    %p72 = scmp.ne.s32.totalorder %s55, %s71
    %p73 = scmp.eq.s32.totalorder %s21, 0
    %p74 = por %p72, %p73
    %s76 = sadd.s32 %s75, 1
    %p79 = scmp.eq.s32.totalorder %s15, 1
    %p80 = scmp.ne.s32.totalorder %s75, %s77
    %p81 = scmp.eq.s32.totalorder %s15, 0
    %p82 = por %p80, %p81
    %p83 = scmp.ne.s32.totalorder %s75, %s77
    %p84 = scmp.eq.s32.totalorder %s20, 1
    %p85 = por %p83, %p84
    %p86 = scmp.ne.s32.totalorder %s77, %s78
    %p87 = scmp.eq.s32.totalorder %s20, 0
    %p88 = por %p86, %p87
    %p89 = scmp.ne.s32.totalorder %s77, %s78
    %p90 = scmp.eq.s32.totalorder %s21, 1
    %p91 = por %p89, %p90
    %p93 = scmp.ne.s32.totalorder %s78, %s92
    %p94 = scmp.eq.s32.totalorder %s21, 0
    %p95 = por %p93, %p94
    %s97 = sadd.s32 %s96, 1
    %p100 = scmp.eq.s32.totalorder %s15, 1
    %p101 = scmp.ne.s32.totalorder %s96, %s98
    %p102 = scmp.eq.s32.totalorder %s15, 0
    %p103 = por %p101, %p102
    %p104 = scmp.ne.s32.totalorder %s96, %s98
    %p105 = scmp.eq.s32.totalorder %s20, 1
    %p106 = por %p104, %p105
    %p107 = scmp.ne.s32.totalorder %s98, %s99
    %p108 = scmp.eq.s32.totalorder %s20, 0
    %p109 = por %p107, %p108
    %p110 = scmp.ne.s32.totalorder %s98, %s99
    %p111 = scmp.eq.s32.totalorder %s21, 1
    %p112 = por %p110, %p111
    %p114 = scmp.ne.s32.totalorder %s99, %s113
    %p115 = scmp.eq.s32.totalorder %s21, 0
    %p116 = por %p114, %p115
    %s118 = sadd.s32 %s117, 1
    %p121 = scmp.eq.s32.totalorder %s15, 1
    %p122 = scmp.ne.s32.totalorder %s117, %s119
    %p123 = scmp.eq.s32.totalorder %s15, 0
    %p124 = por %p122, %p123
    %p125 = scmp.ne.s32.totalorder %s117, %s119
    %p126 = scmp.eq.s32.totalorder %s20, 1
    %p127 = por %p125, %p126
    %p128 = scmp.ne.s32.totalorder %s119, %s120
    %p129 = scmp.eq.s32.totalorder %s20, 0
    %p130 = por %p128, %p129
    %p131 = scmp.ne.s32.totalorder %s119, %s120
    %p132 = scmp.eq.s32.totalorder %s21, 1
    %p133 = por %p131, %p132
    %p135 = scmp.ne.s32.totalorder %s120, %s134
    %p136 = scmp.eq.s32.totalorder %s21, 0
    %p137 = por %p135, %p136
    %s139 = sadd.s32 %s138, 1
    %p142 = scmp.eq.s32.totalorder %s15, 1
    %p143 = scmp.ne.s32.totalorder %s138, %s140
    %p144 = scmp.eq.s32.totalorder %s15, 0
    %p145 = por %p143, %p144
    %p146 = scmp.ne.s32.totalorder %s138, %s140
    %p147 = scmp.eq.s32.totalorder %s20, 1
    %p148 = por %p146, %p147
    %p149 = scmp.ne.s32.totalorder %s140, %s141
    %p150 = scmp.eq.s32.totalorder %s20, 0
    %p151 = por %p149, %p150
    %p152 = scmp.ne.s32.totalorder %s140, %s141
    %p153 = scmp.eq.s32.totalorder %s21, 1
    %p154 = por %p152, %p153
    %p156 = scmp.ne.s32.totalorder %s141, %s155
    %p157 = scmp.eq.s32.totalorder %s21, 0
    %p158 = por %p156, %p157
    %s160 = sadd.s32 %s159, 1
    %p163 = scmp.eq.s32.totalorder %s15, 1
    %p164 = scmp.ne.s32.totalorder %s159, %s161
    %p165 = scmp.eq.s32.totalorder %s15, 0
    %p166 = por %p164, %p165
    %p167 = scmp.ne.s32.totalorder %s159, %s161
    %p168 = scmp.eq.s32.totalorder %s20, 1
    %p169 = por %p167, %p168
    %p170 = scmp.ne.s32.totalorder %s161, %s162
    %p171 = scmp.eq.s32.totalorder %s20, 0
    %p172 = por %p170, %p171
    %p173 = scmp.ne.s32.totalorder %s161, %s162
    %p174 = scmp.eq.s32.totalorder %s21, 1
    %p175 = por %p173, %p174
    %p177 = scmp.ne.s32.totalorder %s162, %s176
    %p178 = scmp.eq.s32.totalorder %s21, 0
    %p179 = por %p177, %p178
    %s181 = sadd.s32 %s180, 1
    %p184 = scmp.eq.s32.totalorder %s15, 1
    %p185 = scmp.ne.s32.totalorder %s180, %s182
    %p186 = scmp.eq.s32.totalorder %s15, 0
    %p187 = por %p185, %p186
    %p188 = scmp.ne.s32.totalorder %s180, %s182
    %p189 = scmp.eq.s32.totalorder %s20, 1
    %p190 = por %p188, %p189
    %p191 = scmp.ne.s32.totalorder %s182, %s183
    %p192 = scmp.eq.s32.totalorder %s20, 0
    %p193 = por %p191, %p192
    %p194 = scmp.ne.s32.totalorder %s182, %s183
    %p195 = scmp.eq.s32.totalorder %s21, 1
    %p196 = por %p194, %p195
    %p198 = scmp.ne.s32.totalorder %s183, %s197
    %p199 = scmp.eq.s32.totalorder %s21, 0
    %p200 = por %p198, %p199
    %s202 = sadd.s32 %s201, 1
    %p205 = scmp.eq.s32.totalorder %s15, 1
    %p206 = scmp.ne.s32.totalorder %s201, %s203
    %p207 = scmp.eq.s32.totalorder %s15, 0
    %p208 = por %p206, %p207
    %p209 = scmp.ne.s32.totalorder %s201, %s203
    %p210 = scmp.eq.s32.totalorder %s20, 1
    %p211 = por %p209, %p210
    %p212 = scmp.ne.s32.totalorder %s203, %s204
    %p213 = scmp.eq.s32.totalorder %s20, 0
    %p214 = por %p212, %p213
    %p215 = scmp.ne.s32.totalorder %s203, %s204
    %p216 = scmp.eq.s32.totalorder %s21, 1
    %p217 = por %p215, %p216
    %p219 = scmp.ne.s32.totalorder %s204, %s218
    %p220 = scmp.eq.s32.totalorder %s21, 0
    %p221 = por %p219, %p220
    %s222 = ssub.s32 %s15, %s22
    %p223 = scmp.eq.s32.totalorder %s222, 0
    %s225 = sadd.s32 %s224, 1
    %s226 = scalar_select %p223, %s224, %s225
    %p229 = pneg %p223
    %p230 = scmp.eq.s32.totalorder %s15, 1
    %p231 = por %p229, %p230
    %p232 = scmp.ne.s32.totalorder %s224, %s227
    %p233 = scmp.eq.s32.totalorder %s15, 0
    %p234 = por %p232, %p233
    %p235 = scmp.ne.s32.totalorder %s224, %s227
    %p236 = scmp.eq.s32.totalorder %s20, 1
    %p237 = por %p235, %p236
    %p238 = scmp.ne.s32.totalorder %s227, %s228
    %p239 = scmp.eq.s32.totalorder %s20, 0
    %p240 = por %p238, %p239
    %p241 = scmp.ne.s32.totalorder %s227, %s228
    %p242 = scmp.eq.s32.totalorder %s21, 1
    %p243 = por %p241, %p242
    %p245 = scmp.ne.s32.totalorder %s228, %s244
    %p246 = scmp.eq.s32.totalorder %s21, 0
    %p247 = por %p245, %p246
    %p248 = scmp.le.s32.totalorder 1, %s15
    %p249 = scmp.lt.s32.totalorder %s15, 3
    %p250 = pnand %p248, %p249
    %p251 = pneg %p250
    // Predicated region
    $region9: #{basic_residual_block.1} parent=5 // pred_check
      _
    $region10: #{basic_residual_block.1} parent=5 // pred_check_branch
      %253 = sbr.rel (%p250) target = $region12
    $region11: #{basic_residual_block.1} parent=5 // pred_region
      %s254 = ssub.s32 %s15, 1
      // Predicated region
      $region13: #{basic_residual_block.1} parent=11 // pred_check
        %p255 = pneg %p88
      $region14: #{basic_residual_block.1} parent=11 // pred_check_branch
        %257 = sbr.rel (%p255) target = $region16
      $region15: #{basic_residual_block.1} parent=11 // pred_region
        _
      $region16: #{basic_residual_block.1} parent=11 // pred_fallthru
        _
      // Predicated region
      $region17: #{basic_residual_block.1} parent=11 // pred_check
        %p258 = pneg %p109
      $region18: #{basic_residual_block.1} parent=11 // pred_check_branch
        %260 = sbr.rel (%p258) target = $region20
      $region19: #{basic_residual_block.1} parent=11 // pred_region
        _
      $region20: #{basic_residual_block.1} parent=11 // pred_fallthru
        _
      // Predicated region
      $region21: #{basic_residual_block.1} parent=11 // pred_check
        %p261 = pneg %p130
      $region22: #{basic_residual_block.1} parent=11 // pred_check_branch
        %263 = sbr.rel (%p261) target = $region24
      $region23: #{basic_residual_block.1} parent=11 // pred_region
        _
      $region24: #{basic_residual_block.1} parent=11 // pred_fallthru
        _
      // Predicated region
      $region25: #{basic_residual_block.1} parent=11 // pred_check
        %p264 = pneg %p151
      $region26: #{basic_residual_block.1} parent=11 // pred_check_branch
        %266 = sbr.rel (%p264) target = $region28
      $region27: #{basic_residual_block.1} parent=11 // pred_region
        _
      $region28: #{basic_residual_block.1} parent=11 // pred_fallthru
        _
      // Predicated region
      $region29: #{basic_residual_block.1} parent=11 // pred_check
        %p267 = pneg %p172
      $region30: #{basic_residual_block.1} parent=11 // pred_check_branch
        %269 = sbr.rel (%p267) target = $region32
      $region31: #{basic_residual_block.1} parent=11 // pred_region
        _
      $region32: #{basic_residual_block.1} parent=11 // pred_fallthru
        _
      // Predicated region
      $region33: #{basic_residual_block.1} parent=11 // pred_check
        %p270 = pneg %p193
      $region34: #{basic_residual_block.1} parent=11 // pred_check_branch
        %272 = sbr.rel (%p270) target = $region36
      $region35: #{basic_residual_block.1} parent=11 // pred_region
        _
      $region36: #{basic_residual_block.1} parent=11 // pred_fallthru
        _
      // Predicated region
      $region37: #{basic_residual_block.1} parent=11 // pred_check
        %p273 = pneg %p214
      $region38: #{basic_residual_block.1} parent=11 // pred_check_branch
        %275 = sbr.rel (%p273) target = $region40
      $region39: #{basic_residual_block.1} parent=11 // pred_region
        _
      $region40: #{basic_residual_block.1} parent=11 // pred_fallthru
        _
    $region12: #{basic_residual_block.1} parent=5 // pred_fallthru
      _
    %p276 = scmp.lt.s32.totalorder %s15, 2
    // Predicated region
    $region41: #{basic_residual_block.1} parent=5 // pred_check
      %p277 = pneg %p276
    $region42: #{basic_residual_block.1} parent=5 // pred_check_branch
      %279 = sbr.rel (%p277) target = $region44
    $region43: #{basic_residual_block.1} parent=5 // pred_region
      // Predicated region
      $region45: #{basic_residual_block.1} parent=43 // pred_check
        %p280 = pneg %p35
      $region46: #{basic_residual_block.1} parent=43 // pred_check_branch
        %282 = sbr.rel (%p280) target = $region48
      $region47: #{basic_residual_block.1} parent=43 // pred_region
        %p283 = scmp.lt.s32.totalorder %s15, 1
        %s284 = scalar_select %p283, %s15, 1
        %s285 = smul.addr %s284, 6
        %s286 = smul.addr %s285, 4
        %s287 = scalar_lea.vmem %s0, %s286
      $region48: #{basic_residual_block.1} parent=43 // pred_fallthru
        _
      // Predicated region
      $region49: #{basic_residual_block.1} parent=43 // pred_check
        %p288 = pneg %p61
      $region50: #{basic_residual_block.1} parent=43 // pred_check_branch
        %290 = sbr.rel (%p288) target = $region52
      $region51: #{basic_residual_block.1} parent=43 // pred_region
        %p291 = scmp.lt.s32.totalorder %s15, 1
        %s292 = scalar_select %p291, %s15, 1
        %s293 = smul.addr %s292, 2
        %s294 = smul.addr %s293, 8
        %s295 = scalar_lea.vmem %s1, %s294
      $region52: #{basic_residual_block.1} parent=43 // pred_fallthru
        _
    $region44: #{basic_residual_block.1} parent=5 // pred_fallthru
      _
    %p296 = scmp.le.s32.totalorder 1, %s15
    %p297 = scmp.lt.s32.totalorder %s15, 3
    %p298 = pnand %p296, %p297
    %p299 = pneg %p298
    // Predicated region
    $region53: #{basic_residual_block.1} parent=5 // pred_check
      _
    $region54: #{basic_residual_block.1} parent=5 // pred_check_branch
      %301 = sbr.rel (%p298) target = $region56
    $region55: #{basic_residual_block.1} parent=5 // pred_region
      %s302 = ssub.s32 %s15, 1
      %p303 = scmp.lt.s32.totalorder %s20, 1
      %s304 = scalar_select %p303, %s20, 1
      %s305 = smul.addr %s304, 6
      %s306 = smul.addr %s305, 4
      %s307 = scalar_lea.vmem %s0, %s306
      %p308 = pneg %p41
      %p309 = pneg %p38
      %p310 = scmp.lt.s32.totalorder %s20, 1
      %s311 = scalar_select %p310, %s20, 1
      %s312 = smul.addr %s311, 2
      %s313 = smul.addr %s312, 8
      %s314 = scalar_lea.vmem %s1, %s313
      %p315 = pneg %p67
      %p316 = pneg %p64
      %p317 = pneg %p88
      %p318 = pneg %p85
      %p319 = pneg %p109
      %p320 = pneg %p106
      %p321 = pneg %p130
      %p322 = pneg %p127
      %p323 = pneg %p151
      %p324 = pneg %p148
      %p325 = pneg %p172
      %p326 = pneg %p169
      %p327 = pneg %p193
      %p328 = pneg %p190
      %p329 = pneg %p214
      %p330 = pneg %p211
      %p331 = pneg %p240
      %p332 = pneg %p237
      %p333 = scmp.lt.s32.totalorder %s20, 1
      %s334 = scalar_select %p333, %s20, 1
      %s335 = smul.addr %s334, 2
      %s336 = smul.addr %s335, 4
      %s337 = scalar_lea.vmem %s9, %s336
      %p338 = scmp.lt.s32.totalorder %s20, 1
      %s339 = scalar_select %p338, %s20, 1
      %s340 = smul.addr %s339, 6
      %s341 = smul.addr %s340, 4
      %s342 = scalar_lea.vmem %s0, %s341
      %p343 = scmp.lt.s32.totalorder %s20, 1
      %s344 = scalar_select %p343, %s20, 1
      %s345 = smul.addr %s344, 2
      %s346 = smul.addr %s345, 8
      %s347 = scalar_lea.vmem %s1, %s346
      %p348 = scmp.lt.s32.totalorder %s20, 1
      %s349 = scalar_select %p348, %s20, 1
      %s350 = smul.addr %s349, 2
      %s351 = smul.addr %s350, 4
      %s352 = scalar_lea.vmem %s9, %s351
      %v354 = vld [vmem:[%s342] sm:$0xff]
      %v355 = vld [vmem:[%s342 + $0x8] sm:$0xff]
      %v356 = vld [vmem:[%s342 + $0x10] sm:$0x33]
      %v357 = vld [vmem:[%s2] sm:$0xff]
      %v358 = vld [vmem:[%s2 + $0x8] sm:$0xff]
      %v359 = vld [vmem:[%s2 + $0x10] sm:$0xff]
      %v360 = vld [vmem:[%s2 + $0x18] sm:$0xff]
      %v361 = vld [vmem:[%s2 + $0x20] sm:$0xff]
      %v362 = vld [vmem:[%s2 + $0x28] sm:$0xff]
      %v363 = vld [vmem:[%s2 + $0x30] sm:$0xff]
      %v364 = vld [vmem:[%s2 + $0x38] sm:$0xff]
      %v365 = vld [vmem:[%s2 + $0x40] sm:$0xff]
      %v366 = vld [vmem:[%s2 + $0x48] sm:$0xff]
      %v367 = vld [vmem:[%s2 + $0x50] sm:$0xff]
      %v368 = vld [vmem:[%s2 + $0x58] sm:$0xff]
      %v369 = vld [vmem:[%s2 + $0x60] sm:$0xff]
      %v370 = vld [vmem:[%s2 + $0x68] sm:$0xff]
      %v371 = vld [vmem:[%s2 + $0x70] sm:$0xff]
      %v372 = vld [vmem:[%s2 + $0x78] sm:$0xff]
      %v373 = vld [vmem:[%s2 + $0x80] sm:$0xff]
      %v374 = vld [vmem:[%s2 + $0x88] sm:$0xff]
      %v375 = vld [vmem:[%s2 + $0x90] sm:$0xff]
      %v376 = vld [vmem:[%s2 + $0x98] sm:$0xff]
      %s377 = scalar_lea.vmem %s2, 160
      %v378 = vld [vmem:[%s377] sm:$0xff]
      %v379 = vld [vmem:[%s377 + $0x8] sm:$0xff]
      %v380 = vld [vmem:[%s377 + $0x10] sm:$0xff]
      %v381 = vld [vmem:[%s377 + $0x18] sm:$0xff]
      %v382 = vld [vmem:[%s377 + $0x20] sm:$0xff]
      %v383 = vld [vmem:[%s377 + $0x28] sm:$0xff]
      %v384 = vld [vmem:[%s377 + $0x30] sm:$0xff]
      %v385 = vld [vmem:[%s377 + $0x38] sm:$0xff]
      %v386 = vld [vmem:[%s377 + $0x40] sm:$0xff]
      %v387 = vld [vmem:[%s377 + $0x48] sm:$0xff]
      %v388 = vld [vmem:[%s377 + $0x50] sm:$0xff]
      %v389 = vld [vmem:[%s377 + $0x58] sm:$0xff]
      %v390 = vld [vmem:[%s377 + $0x60] sm:$0xff]
      %v391 = vld [vmem:[%s377 + $0x68] sm:$0xff]
      %v392 = vld [vmem:[%s377 + $0x70] sm:$0xff]
      %v393 = vld [vmem:[%s377 + $0x78] sm:$0xff]
      %v394 = vld [vmem:[%s377 + $0x80] sm:$0xff]
      %v395 = vld [vmem:[%s377 + $0x88] sm:$0xff]
      %v396 = vld [vmem:[%s377 + $0x90] sm:$0xff]
      %v397 = vld [vmem:[%s377 + $0x98] sm:$0xff]
      %v401 = vunpack.c.l.b16 %v354
      %v402 = vunpack.c.h.b16 %v354
      %v403 = vunpack.c.l.b16 %v355
      %v404 = vunpack.c.h.b16 %v355
      %v405 = vunpack.c.l.b16 %v356
      %v406 = vunpack.c.h.b16 %v356
      %v407 = vpack.c.b16 %v403, %v401
      %v408 = vpack.c.b16 %v404, %v402
      %v409 = vpack.c.b16 %v405, %v405
      %v410 = vpack.c.b16 %v406, %v406
      %vm411 = vsmask.f32 7424
      %v413 = vshrl.u32 %v407, 16
      %v415 = vshll.u32 %v407, 16
      %v417 = vrot.slane %v415, 1
      %v418 = vor.u32 %v413, %v417
      %v420 = vshll.u32 %v409, 16
      %v422 = vrot.slane %v420, 1
      %v423 = vsel %vm411, %v418, %v422
      %v425 = vshrl.u32 %v408, 16
      %v427 = vshll.u32 %v408, 16
      %v429 = vrot.slane %v427, 1
      %v430 = vor.u32 %v425, %v429
      %v432 = vshll.u32 %v410, 16
      %v434 = vrot.slane %v432, 1
      %v435 = vsel %vm411, %v430, %v434
      %v436 = vshrl.u32 %v409, 16
      %v438 = vor.u32 %v436, %v422
      %v439 = vshrl.u32 %v410, 16
      %v441 = vor.u32 %v439, %v434
      %v464 = vunpack.c.l.b16 %v378
      %v465 = vunpack.c.h.b16 %v378
      %v466 = vunpack.c.l.b16 %v379
      %v467 = vunpack.c.h.b16 %v379
      %v468 = vunpack.c.l.b16 %v380
      %v469 = vunpack.c.h.b16 %v380
      %v470 = vunpack.c.l.b16 %v381
      %v471 = vunpack.c.h.b16 %v381
      %v472 = vunpack.c.l.b16 %v382
      %v473 = vunpack.c.h.b16 %v382
      %v474 = vunpack.c.l.b16 %v383
      %v475 = vunpack.c.h.b16 %v383
      %v476 = vunpack.c.l.b16 %v384
      %v477 = vunpack.c.h.b16 %v384
      %v478 = vunpack.c.l.b16 %v385
      %v479 = vunpack.c.h.b16 %v385
      %v480 = vunpack.c.l.b16 %v386
      %v481 = vunpack.c.h.b16 %v386
      %v482 = vunpack.c.l.b16 %v387
      %v483 = vunpack.c.h.b16 %v387
      %v484 = vunpack.c.l.b16 %v388
      %v485 = vunpack.c.h.b16 %v388
      %v486 = vunpack.c.l.b16 %v389
      %v487 = vunpack.c.h.b16 %v389
      %v488 = vunpack.c.l.b16 %v390
      %v489 = vunpack.c.h.b16 %v390
      %v490 = vunpack.c.l.b16 %v391
      %v491 = vunpack.c.h.b16 %v391
      %v492 = vunpack.c.l.b16 %v392
      %v493 = vunpack.c.h.b16 %v392
      %v494 = vunpack.c.l.b16 %v393
      %v495 = vunpack.c.h.b16 %v393
      %v496 = vunpack.c.l.b16 %v394
      %v497 = vunpack.c.h.b16 %v394
      %v498 = vunpack.c.l.b16 %v395
      %v499 = vunpack.c.h.b16 %v395
      %v500 = vunpack.c.l.b16 %v396
      %v501 = vunpack.c.h.b16 %v396
      %v502 = vunpack.c.l.b16 %v397
      %v503 = vunpack.c.h.b16 %v397
      %v504 = vpack.c.b16 %v466, %v464
      %v505 = vpack.c.b16 %v467, %v465
      %v506 = vpack.c.b16 %v470, %v468
      %v507 = vpack.c.b16 %v471, %v469
      %v508 = vpack.c.b16 %v474, %v472
      %v509 = vpack.c.b16 %v475, %v473
      %v510 = vpack.c.b16 %v478, %v476
      %v511 = vpack.c.b16 %v479, %v477
      %v512 = vpack.c.b16 %v482, %v480
      %v513 = vpack.c.b16 %v483, %v481
      %v514 = vpack.c.b16 %v486, %v484
      %v515 = vpack.c.b16 %v487, %v485
      %v516 = vpack.c.b16 %v490, %v488
      %v517 = vpack.c.b16 %v491, %v489
      %v518 = vpack.c.b16 %v494, %v492
      %v519 = vpack.c.b16 %v495, %v493
      %v520 = vpack.c.b16 %v498, %v496
      %v521 = vpack.c.b16 %v499, %v497
      %v522 = vpack.c.b16 %v502, %v500
      %v523 = vpack.c.b16 %v503, %v501
      %vm544 = vcmask 261120
      %v546 = vsel %vm544, %v435, 0
      %v549 = vsel %vm544, %v441, 0
      %551 = vmatprep.subr.bf16.mxu0 %v505
      %552 = vmatpush1.bf16.msra.mxu0 %v504
      %553 = vmatprep.subr.bf16.mxu0 %v507
      %554 = vmatpush1.bf16.msra.mxu0 %v506
      %555 = vmatprep.subr.bf16.mxu0 %v509
      %556 = vmatpush1.bf16.msra.mxu0 %v508
      %557 = vmatprep.subr.bf16.mxu0 %v511
      %558 = vmatpush1.bf16.msra.mxu0 %v510
      %559 = vmatprep.subr.bf16.mxu0 %v513
      %560 = vmatpush1.bf16.msra.mxu0 %v512
      %561 = vmatprep.subr.bf16.mxu0 %v515
      %562 = vmatpush1.bf16.msra.mxu0 %v514
      %563 = vmatprep.subr.bf16.mxu0 %v517
      %564 = vmatpush1.bf16.msra.mxu0 %v516
      %565 = vmatprep.subr.bf16.mxu0 %v519
      %566 = vmatpush1.bf16.msra.mxu0 %v518
      %567 = vmatprep.subr.bf16.mxu0 %v521
      %568 = vmatpush1.bf16.msra.mxu0 %v520
      %569 = vmatprep.subr.bf16.mxu0 %v523
      %570 = vmatpush1.bf16.msra.mxu0 %v522
      %571 = vmatprep.subr.bf16.mxu0 0
      %572 = vmatpush1.bf16.msra.mxu0 0
      %573 = vmatprep.subr.bf16.mxu0 0
      %574 = vmatpush1.bf16.msra.mxu0 0
      %575 = vmatprep.subr.bf16.mxu0 0
      %576 = vmatpush1.bf16.msra.mxu0 0
      %577 = vmatprep.subr.bf16.mxu0 0
      %578 = vmatpush1.bf16.msra.mxu0 0
      %579 = vmatprep.subr.bf16.mxu0 0
      %580 = vmatpush1.bf16.msra.mxu0 0
      %581 = vmatprep.subr.bf16.mxu0 0
      %582 = vmatpush1.bf16.msra.mxu0 0
      %583 = vmatprep.mubr.bf16.mxu0 %v546
      %584 = vmatmul.mubr.bf16.gmra.mrb[0].mxu0 %v423
      %v585 = vpop.f32.mrb[0].mxu0
      %v586 = vadd.f32 0.0, %v585
      %v587 = vpop.f32.mrb[0].mxu0
      %v588 = vadd.f32 0.0, %v587
      %v589 = vpop.f32.mrb[0].mxu0
      %v590 = vadd.f32 0.0, %v589
      %v591 = vpop.f32.mrb[0].mxu0
      %v592 = vadd.f32 0.0, %v591
      %593 = vmatprep.mubr.bf16.mxu0 %v549
      %594 = vmatmul.mubr.bf16.gmra.mrb[0].mxu0 %v438
      %v595 = vpop.f32.mrb[0].mxu0
      %v596 = vadd.f32 0.0, %v595
      %v597 = vpop.f32.mrb[0].mxu0
      %v598 = vadd.f32 0.0, %v597
      %v599 = vpop.f32.mrb[0].mxu0
      %v600 = vpop.f32.mrb[0].mxu0
      %601 = vdwg.mxu0
      %v624 = vunpack.c.l.b16 %v357
      %v625 = vunpack.c.h.b16 %v357
      %v626 = vunpack.c.l.b16 %v358
      %v627 = vunpack.c.h.b16 %v358
      %v628 = vunpack.c.l.b16 %v359
      %v629 = vunpack.c.h.b16 %v359
      %v630 = vunpack.c.l.b16 %v360
      %v631 = vunpack.c.h.b16 %v360
      %v632 = vunpack.c.l.b16 %v361
      %v633 = vunpack.c.h.b16 %v361
      %v634 = vunpack.c.l.b16 %v362
      %v635 = vunpack.c.h.b16 %v362
      %v636 = vunpack.c.l.b16 %v363
      %v637 = vunpack.c.h.b16 %v363
      %v638 = vunpack.c.l.b16 %v364
      %v639 = vunpack.c.h.b16 %v364
      %v640 = vunpack.c.l.b16 %v365
      %v641 = vunpack.c.h.b16 %v365
      %v642 = vunpack.c.l.b16 %v366
      %v643 = vunpack.c.h.b16 %v366
      %v644 = vunpack.c.l.b16 %v367
      %v645 = vunpack.c.h.b16 %v367
      %v646 = vunpack.c.l.b16 %v368
      %v647 = vunpack.c.h.b16 %v368
      %v648 = vunpack.c.l.b16 %v369
      %v649 = vunpack.c.h.b16 %v369
      %v650 = vunpack.c.l.b16 %v370
      %v651 = vunpack.c.h.b16 %v370
      %v652 = vunpack.c.l.b16 %v371
      %v653 = vunpack.c.h.b16 %v371
      %v654 = vunpack.c.l.b16 %v372
      %v655 = vunpack.c.h.b16 %v372
      %v656 = vunpack.c.l.b16 %v373
      %v657 = vunpack.c.h.b16 %v373
      %v658 = vunpack.c.l.b16 %v374
      %v659 = vunpack.c.h.b16 %v374
      %v660 = vunpack.c.l.b16 %v375
      %v661 = vunpack.c.h.b16 %v375
      %v662 = vunpack.c.l.b16 %v376
      %v663 = vunpack.c.h.b16 %v376
      %v664 = vpack.c.b16 %v626, %v624
      %v665 = vpack.c.b16 %v627, %v625
      %v666 = vpack.c.b16 %v630, %v628
      %v667 = vpack.c.b16 %v631, %v629
      %v668 = vpack.c.b16 %v634, %v632
      %v669 = vpack.c.b16 %v635, %v633
      %v670 = vpack.c.b16 %v638, %v636
      %v671 = vpack.c.b16 %v639, %v637
      %v672 = vpack.c.b16 %v642, %v640
      %v673 = vpack.c.b16 %v643, %v641
      %v674 = vpack.c.b16 %v646, %v644
      %v675 = vpack.c.b16 %v647, %v645
      %v676 = vpack.c.b16 %v650, %v648
      %v677 = vpack.c.b16 %v651, %v649
      %v678 = vpack.c.b16 %v654, %v652
      %v679 = vpack.c.b16 %v655, %v653
      %v680 = vpack.c.b16 %v658, %v656
      %v681 = vpack.c.b16 %v659, %v657
      %v682 = vpack.c.b16 %v662, %v660
      %v683 = vpack.c.b16 %v663, %v661
      %v704 = vsel %vm544, %v408, 0
      %v706 = vsel %vm544, %v410, 0
      %708 = vmatprep.subr.bf16.mxu0 %v665
      %709 = vmatpush1.bf16.msra.mxu0 %v664
      %710 = vmatprep.subr.bf16.mxu0 %v667
      %711 = vmatpush1.bf16.msra.mxu0 %v666
      %712 = vmatprep.subr.bf16.mxu0 %v669
      %713 = vmatpush1.bf16.msra.mxu0 %v668
      %714 = vmatprep.subr.bf16.mxu0 %v671
      %715 = vmatpush1.bf16.msra.mxu0 %v670
      %716 = vmatprep.subr.bf16.mxu0 %v673
      %717 = vmatpush1.bf16.msra.mxu0 %v672
      %718 = vmatprep.subr.bf16.mxu0 %v675
      %719 = vmatpush1.bf16.msra.mxu0 %v674
      %720 = vmatprep.subr.bf16.mxu0 %v677
      %721 = vmatpush1.bf16.msra.mxu0 %v676
      %722 = vmatprep.subr.bf16.mxu0 %v679
      %723 = vmatpush1.bf16.msra.mxu0 %v678
      %724 = vmatprep.subr.bf16.mxu0 %v681
      %725 = vmatpush1.bf16.msra.mxu0 %v680
      %726 = vmatprep.subr.bf16.mxu0 %v683
      %727 = vmatpush1.bf16.msra.mxu0 %v682
      %728 = vmatprep.subr.bf16.mxu0 0
      %729 = vmatpush1.bf16.msra.mxu0 0
      %730 = vmatprep.subr.bf16.mxu0 0
      %731 = vmatpush1.bf16.msra.mxu0 0
      %732 = vmatprep.subr.bf16.mxu0 0
      %733 = vmatpush1.bf16.msra.mxu0 0
      %734 = vmatprep.subr.bf16.mxu0 0
      %735 = vmatpush1.bf16.msra.mxu0 0
      %736 = vmatprep.subr.bf16.mxu0 0
      %737 = vmatpush1.bf16.msra.mxu0 0
      %738 = vmatprep.subr.bf16.mxu0 0
      %739 = vmatpush1.bf16.msra.mxu0 0
      %740 = vmatprep.mubr.bf16.mxu0 %v704
      %741 = vmatmul.mubr.bf16.gmra.mrb[0].mxu0 %v407
      %v742 = vpop.f32.mrb[0].mxu0
      %v743 = vadd.f32 %v586, %v742
      %v744 = vpop.f32.mrb[0].mxu0
      %v745 = vadd.f32 %v588, %v744
      %v746 = vpop.f32.mrb[0].mxu0
      %v747 = vadd.f32 %v590, %v746
      %v748 = vpop.f32.mrb[0].mxu0
      %v749 = vadd.f32 %v592, %v748
      %750 = vmatprep.mubr.bf16.mxu0 %v706
      %751 = vmatmul.mubr.bf16.gmra.mrb[0].mxu0 %v409
      %v752 = vpop.f32.mrb[0].mxu0
      %v753 = vadd.f32 %v596, %v752
      %v754 = vpop.f32.mrb[0].mxu0
      %v755 = vadd.f32 %v598, %v754
      %v756 = vpop.f32.mrb[0].mxu0
      %v757 = vpop.f32.mrb[0].mxu0
      %758 = vdwg.mxu0
      %s759 = scalar_lea.vmem %s2, 320
      %v760 = vld [vmem:[%s759] sm:$0xff]
      %v761 = vld [vmem:[%s759 + $0x8] sm:$0xff]
      %v762 = vld [vmem:[%s759 + $0x10] sm:$0xff]
      %v763 = vld [vmem:[%s759 + $0x18] sm:$0xff]
      %v764 = vld [vmem:[%s759 + $0x20] sm:$0xff]
      %v765 = vld [vmem:[%s759 + $0x28] sm:$0xff]
      %v766 = vld [vmem:[%s759 + $0x30] sm:$0xff]
      %v767 = vld [vmem:[%s759 + $0x38] sm:$0xff]
      %v768 = vld [vmem:[%s759 + $0x40] sm:$0xff]
      %v769 = vld [vmem:[%s759 + $0x48] sm:$0xff]
      %v770 = vld [vmem:[%s759 + $0x50] sm:$0xff]
      %v771 = vld [vmem:[%s759 + $0x58] sm:$0xff]
      %v772 = vld [vmem:[%s759 + $0x60] sm:$0xff]
      %v773 = vld [vmem:[%s759 + $0x68] sm:$0xff]
      %v774 = vld [vmem:[%s759 + $0x70] sm:$0xff]
      %v775 = vld [vmem:[%s759 + $0x78] sm:$0xff]
      %v776 = vld [vmem:[%s759 + $0x80] sm:$0xff]
      %v777 = vld [vmem:[%s759 + $0x88] sm:$0xff]
      %v778 = vld [vmem:[%s759 + $0x90] sm:$0xff]
      %v779 = vld [vmem:[%s759 + $0x98] sm:$0xff]
      %vm780 = vcmask 1046528
      %v781 = vrot.slane %v407, 1
      %v782 = vrot.slane %v409, 1
      %v783 = vsel %vm780, %v781, %v782
      %v784 = vrot.slane %v408, 1
      %v785 = vrot.slane %v410, 1
      %v786 = vsel %vm780, %v784, %v785
      %v809 = vunpack.c.l.b16 %v760
      %v810 = vunpack.c.h.b16 %v760
      %v811 = vunpack.c.l.b16 %v761
      %v812 = vunpack.c.h.b16 %v761
      %v813 = vunpack.c.l.b16 %v762
      %v814 = vunpack.c.h.b16 %v762
      %v815 = vunpack.c.l.b16 %v763
      %v816 = vunpack.c.h.b16 %v763
      %v817 = vunpack.c.l.b16 %v764
      %v818 = vunpack.c.h.b16 %v764
      %v819 = vunpack.c.l.b16 %v765
      %v820 = vunpack.c.h.b16 %v765
      %v821 = vunpack.c.l.b16 %v766
      %v822 = vunpack.c.h.b16 %v766
      %v823 = vunpack.c.l.b16 %v767
      %v824 = vunpack.c.h.b16 %v767
      %v825 = vunpack.c.l.b16 %v768
      %v826 = vunpack.c.h.b16 %v768
      %v827 = vunpack.c.l.b16 %v769
      %v828 = vunpack.c.h.b16 %v769
      %v829 = vunpack.c.l.b16 %v770
      %v830 = vunpack.c.h.b16 %v770
      %v831 = vunpack.c.l.b16 %v771
      %v832 = vunpack.c.h.b16 %v771
      %v833 = vunpack.c.l.b16 %v772
      %v834 = vunpack.c.h.b16 %v772
      %v835 = vunpack.c.l.b16 %v773
      %v836 = vunpack.c.h.b16 %v773
      %v837 = vunpack.c.l.b16 %v774
      %v838 = vunpack.c.h.b16 %v774
      %v839 = vunpack.c.l.b16 %v775
      %v840 = vunpack.c.h.b16 %v775
      %v841 = vunpack.c.l.b16 %v776
      %v842 = vunpack.c.h.b16 %v776
      %v843 = vunpack.c.l.b16 %v777
      %v844 = vunpack.c.h.b16 %v777
      %v845 = vunpack.c.l.b16 %v778
      %v846 = vunpack.c.h.b16 %v778
      %v847 = vunpack.c.l.b16 %v779
      %v848 = vunpack.c.h.b16 %v779
      %v849 = vpack.c.b16 %v811, %v809
      %v850 = vpack.c.b16 %v812, %v810
      %v851 = vpack.c.b16 %v815, %v813
      %v852 = vpack.c.b16 %v816, %v814
      %v853 = vpack.c.b16 %v819, %v817
      %v854 = vpack.c.b16 %v820, %v818
      %v855 = vpack.c.b16 %v823, %v821
      %v856 = vpack.c.b16 %v824, %v822
      %v857 = vpack.c.b16 %v827, %v825
      %v858 = vpack.c.b16 %v828, %v826
      %v859 = vpack.c.b16 %v831, %v829
      %v860 = vpack.c.b16 %v832, %v830
      %v861 = vpack.c.b16 %v835, %v833
      %v862 = vpack.c.b16 %v836, %v834
      %v863 = vpack.c.b16 %v839, %v837
      %v864 = vpack.c.b16 %v840, %v838
      %v865 = vpack.c.b16 %v843, %v841
      %v866 = vpack.c.b16 %v844, %v842
      %v867 = vpack.c.b16 %v847, %v845
      %v868 = vpack.c.b16 %v848, %v846
      %v890 = vsel %vm544, %v786, 0
      %v893 = vsel %vm544, %v785, 0
      %895 = vmatprep.subr.bf16.mxu0 %v850
      %896 = vmatpush1.bf16.msra.mxu0 %v849
      %897 = vmatprep.subr.bf16.mxu0 %v852
      %898 = vmatpush1.bf16.msra.mxu0 %v851
      %899 = vmatprep.subr.bf16.mxu0 %v854
      %900 = vmatpush1.bf16.msra.mxu0 %v853
      %901 = vmatprep.subr.bf16.mxu0 %v856
      %902 = vmatpush1.bf16.msra.mxu0 %v855
      %903 = vmatprep.subr.bf16.mxu0 %v858
      %904 = vmatpush1.bf16.msra.mxu0 %v857
      %905 = vmatprep.subr.bf16.mxu0 %v860
      %906 = vmatpush1.bf16.msra.mxu0 %v859
      %907 = vmatprep.subr.bf16.mxu0 %v862
      %908 = vmatpush1.bf16.msra.mxu0 %v861
      %909 = vmatprep.subr.bf16.mxu0 %v864
      %910 = vmatpush1.bf16.msra.mxu0 %v863
      %911 = vmatprep.subr.bf16.mxu0 %v866
      %912 = vmatpush1.bf16.msra.mxu0 %v865
      %913 = vmatprep.subr.bf16.mxu0 %v868
      %914 = vmatpush1.bf16.msra.mxu0 %v867
      %915 = vmatprep.subr.bf16.mxu0 0
      %916 = vmatpush1.bf16.msra.mxu0 0
      %917 = vmatprep.subr.bf16.mxu0 0
      %918 = vmatpush1.bf16.msra.mxu0 0
      %919 = vmatprep.subr.bf16.mxu0 0
      %920 = vmatpush1.bf16.msra.mxu0 0
      %921 = vmatprep.subr.bf16.mxu0 0
      %922 = vmatpush1.bf16.msra.mxu0 0
      %923 = vmatprep.subr.bf16.mxu0 0
      %924 = vmatpush1.bf16.msra.mxu0 0
      %925 = vmatprep.subr.bf16.mxu0 0
      %926 = vmatpush1.bf16.msra.mxu0 0
      %927 = vmatprep.mubr.bf16.mxu0 %v890
      %928 = vmatmul.mubr.bf16.gmra.mrb[0].mxu0 %v783
      %v929 = vpop.f32.mrb[0].mxu0
      %v930 = vadd.f32 0.0, %v929
      %v931 = vpop.f32.mrb[0].mxu0
      %v932 = vadd.f32 0.0, %v931
      %v933 = vpop.f32.mrb[0].mxu0
      %v934 = vadd.f32 0.0, %v933
      %v935 = vpop.f32.mrb[0].mxu0
      %v936 = vadd.f32 0.0, %v935
      %937 = vmatprep.mubr.bf16.mxu0 %v893
      %938 = vmatmul.mubr.bf16.gmra.mrb[0].mxu0 %v782
      %v939 = vpop.f32.mrb[0].mxu0
      %v940 = vadd.f32 0.0, %v939
      %v941 = vpop.f32.mrb[0].mxu0
      %v942 = vadd.f32 0.0, %v941
      %v943 = vpop.f32.mrb[0].mxu0
      %v944 = vpop.f32.mrb[0].mxu0
      %945 = vdwg.mxu0
      %v946 = vadd.f32 %v743, %v930
      %v947 = vadd.f32 %v745, %v932
      %v948 = vadd.f32 %v747, %v934
      %v949 = vadd.f32 %v749, %v936
      %v950 = vadd.f32 %v753, %v940
      %v951 = vadd.f32 %v755, %v942
      %v952 = vld [vmem:[%s4] sm:$0x3]
      %v954 = vlaneseq
      %v955 = vshrl.u32 %v954, 7
      %v956 = vsub.s32 0, %v955
      %v957 = vrot.slane %v952, %v956
      %v958 = vlaneseq
      %v959 = vshrl.u32 %v958, 7
      %v960 = vsub.s32 1, %v959
      %v961 = vrot.slane %v952, %v960
      %v964 = vmul.f32 %v946, %v957
      %v965 = vmul.f32 %v947, %v961
      %v966 = vmul.f32 %v948, %v957
      %v967 = vmul.f32 %v949, %v961
      %v968 = vmul.f32 %v950, %v957
      %v969 = vmul.f32 %v951, %v961
      %v970 = vld [vmem:[%s5] sm:$0x3]
      %v972 = vlaneseq
      %v973 = vshrl.u32 %v972, 7
      %v974 = vsub.s32 0, %v973
      %v975 = vrot.slane %v970, %v974
      %v976 = vlaneseq
      %v977 = vshrl.u32 %v976, 7
      %v978 = vsub.s32 1, %v977
      %v979 = vrot.slane %v970, %v978
      %v982 = vadd.f32 %v964, %v975
      %v983 = vadd.f32 %v965, %v979
      %v984 = vadd.f32 %v966, %v975
      %v985 = vadd.f32 %v967, %v979
      %v986 = vadd.f32 %v968, %v975
      %v987 = vadd.f32 %v969, %v979
      %v988 = vmax.f32 %v982, 0.0
      %v989 = vmax.f32 %v983, 0.0
      %v990 = vmax.f32 %v984, 0.0
      %v991 = vmax.f32 %v985, 0.0
      %v992 = vmax.f32 %v986, 0.0
      %v993 = vmax.f32 %v987, 0.0
      %v994 = vld [vmem:[%s8] sm:$0xff]
      %v995 = vld [vmem:[%s8 + $0x8] sm:$0xff]
      %v996 = vld [vmem:[%s8 + $0x10] sm:$0x3]
      %998 = vset.pattern.permute.xlu0 0
      %999 = vperm.xlu0 %998, %v994
      %v1000 = vpop.permute.xlu0 %999
      %1003 = vset.pattern.permute.xlu0 0
      %1004 = vperm.xlu0 %1003, %v995
      %v1005 = vpop.permute.xlu0 %1004
      %1008 = vset.pattern.permute.xlu0 0
      %1009 = vperm.xlu0 %1008, %v996
      %v1010 = vpop.permute.xlu0 %1009
      %v1012 = vmul.f32 %v988, %v1000
      %v1013 = vmul.f32 %v989, %v1000
      %v1014 = vmul.f32 %v990, %v1005
      %v1015 = vmul.f32 %v991, %v1005
      %v1016 = vmul.f32 %v992, %v1010
      %v1017 = vmul.f32 %v993, %v1010
      %v1018 = vpack.c.bf16 %v1014, %v1012
      %v1019 = vpack.c.bf16 %v1015, %v1013
      %v1020 = vpack.c.bf16 %v1016, %v1016
      %v1021 = vpack.c.bf16 %v1017, %v1017
      %v1022 = vld [vmem:[%s3] sm:$0xf]
      %v1023 = vld [vmem:[%s3 + $0x4] sm:$0xf]
      %v1024 = vld [vmem:[%s3 + $0x8] sm:$0xf]
      %v1025 = vld [vmem:[%s3 + $0xc] sm:$0xf]
      %v1026 = vld [vmem:[%s3 + $0x10] sm:$0xf]
      %v1027 = vld [vmem:[%s3 + $0x14] sm:$0xf]
      %v1028 = vld [vmem:[%s3 + $0x18] sm:$0xf]
      %v1029 = vld [vmem:[%s3 + $0x1c] sm:$0xf]
      %v1030 = vld [vmem:[%s3 + $0x20] sm:$0xf]
      %v1031 = vld [vmem:[%s3 + $0x24] sm:$0xf]
      %v1032 = vld [vmem:[%s3 + $0x28] sm:$0xf]
      %v1033 = vld [vmem:[%s3 + $0x2c] sm:$0xf]
      %v1034 = vld [vmem:[%s3 + $0x30] sm:$0xf]
      %v1035 = vld [vmem:[%s3 + $0x34] sm:$0xf]
      %v1036 = vld [vmem:[%s3 + $0x38] sm:$0xf]
      %v1037 = vld [vmem:[%s3 + $0x3c] sm:$0xf]
      %v1038 = vld [vmem:[%s3 + $0x40] sm:$0xf]
      %v1039 = vld [vmem:[%s3 + $0x44] sm:$0xf]
      %s1040 = scalar_lea.vmem %s3, 72
      %v1041 = vld [vmem:[%s1040] sm:$0xf]
      %v1042 = vld [vmem:[%s1040 + $0x4] sm:$0xf]
      %v1043 = vld [vmem:[%s1040 + $0x8] sm:$0xf]
      %v1044 = vld [vmem:[%s1040 + $0xc] sm:$0xf]
      %v1045 = vld [vmem:[%s1040 + $0x10] sm:$0xf]
      %v1046 = vld [vmem:[%s1040 + $0x14] sm:$0xf]
      %v1047 = vld [vmem:[%s1040 + $0x18] sm:$0xf]
      %v1048 = vld [vmem:[%s1040 + $0x1c] sm:$0xf]
      %v1049 = vld [vmem:[%s1040 + $0x20] sm:$0xf]
      %v1050 = vld [vmem:[%s1040 + $0x24] sm:$0xf]
      %v1051 = vld [vmem:[%s1040 + $0x28] sm:$0xf]
      %v1052 = vld [vmem:[%s1040 + $0x2c] sm:$0xf]
      %v1053 = vld [vmem:[%s1040 + $0x30] sm:$0xf]
      %v1054 = vld [vmem:[%s1040 + $0x34] sm:$0xf]
      %v1055 = vld [vmem:[%s1040 + $0x38] sm:$0xf]
      %v1056 = vld [vmem:[%s1040 + $0x3c] sm:$0xf]
      %v1057 = vld [vmem:[%s1040 + $0x40] sm:$0xf]
      %v1058 = vld [vmem:[%s1040 + $0x44] sm:$0xf]
      %v1060 = vshrl.u32 %v1018, 16
      %v1062 = vshll.u32 %v1018, 16
      %v1064 = vrot.slane %v1062, 1
      %v1065 = vor.u32 %v1060, %v1064
      %v1067 = vshll.u32 %v1020, 16
      %v1069 = vrot.slane %v1067, 1
      %v1070 = vsel %vm411, %v1065, %v1069
      %v1072 = vshrl.u32 %v1019, 16
      %v1074 = vshll.u32 %v1019, 16
      %v1076 = vrot.slane %v1074, 1
      %v1077 = vor.u32 %v1072, %v1076
      %v1079 = vshll.u32 %v1021, 16
      %v1081 = vrot.slane %v1079, 1
      %v1082 = vsel %vm411, %v1077, %v1081
      %v1102 = vunpack.c.l.b16 %v1041
      %v1103 = vunpack.c.l.b16 %v1042
      %v1104 = vunpack.c.l.b16 %v1043
      %v1105 = vunpack.c.l.b16 %v1044
      %v1106 = vunpack.c.l.b16 %v1045
      %v1107 = vunpack.c.l.b16 %v1046
      %v1108 = vunpack.c.l.b16 %v1047
      %v1109 = vunpack.c.l.b16 %v1048
      %v1110 = vunpack.c.l.b16 %v1049
      %v1111 = vunpack.c.l.b16 %v1050
      %v1112 = vunpack.c.l.b16 %v1051
      %v1113 = vunpack.c.l.b16 %v1052
      %v1114 = vunpack.c.l.b16 %v1053
      %v1115 = vunpack.c.l.b16 %v1054
      %v1116 = vunpack.c.l.b16 %v1055
      %v1117 = vunpack.c.l.b16 %v1056
      %v1118 = vunpack.c.l.b16 %v1057
      %v1119 = vunpack.c.l.b16 %v1058
      %v1120 = vpack.c.b16 %v1103, %v1102
      %v1121 = vpack.c.b16 %v1105, %v1104
      %v1122 = vpack.c.b16 %v1107, %v1106
      %v1123 = vpack.c.b16 %v1109, %v1108
      %v1124 = vpack.c.b16 %v1111, %v1110
      %v1125 = vpack.c.b16 %v1113, %v1112
      %v1126 = vpack.c.b16 %v1115, %v1114
      %v1127 = vpack.c.b16 %v1117, %v1116
      %v1128 = vpack.c.b16 %v1119, %v1118
      %vm1138 = vcmask 130048
      %v1140 = vsel %vm1138, %v1082, 0
      %1142 = vmatprep.subr.bf16.mxu0 0
      %1143 = vmatpush1.bf16.msra.mxu0 %v1120
      %1144 = vmatprep.subr.bf16.mxu0 0
      %1145 = vmatpush1.bf16.msra.mxu0 %v1121
      %1146 = vmatprep.subr.bf16.mxu0 0
      %1147 = vmatpush1.bf16.msra.mxu0 %v1122
      %1148 = vmatprep.subr.bf16.mxu0 0
      %1149 = vmatpush1.bf16.msra.mxu0 %v1123
      %1150 = vmatprep.subr.bf16.mxu0 0
      %1151 = vmatpush1.bf16.msra.mxu0 %v1124
      %1152 = vmatprep.subr.bf16.mxu0 0
      %1153 = vmatpush1.bf16.msra.mxu0 %v1125
      %1154 = vmatprep.subr.bf16.mxu0 0
      %1155 = vmatpush1.bf16.msra.mxu0 %v1126
      %1156 = vmatprep.subr.bf16.mxu0 0
      %1157 = vmatpush1.bf16.msra.mxu0 %v1127
      %1158 = vmatprep.subr.bf16.mxu0 0
      %1159 = vmatpush1.bf16.msra.mxu0 %v1128
      %1160 = vmatprep.subr.bf16.mxu0 0
      %1161 = vmatpush1.bf16.msra.mxu0 0
      %1162 = vmatprep.subr.bf16.mxu0 0
      %1163 = vmatpush1.bf16.msra.mxu0 0
      %1164 = vmatprep.subr.bf16.mxu0 0
      %1165 = vmatpush1.bf16.msra.mxu0 0
      %1166 = vmatprep.subr.bf16.mxu0 0
      %1167 = vmatpush1.bf16.msra.mxu0 0
      %1168 = vmatprep.subr.bf16.mxu0 0
      %1169 = vmatpush1.bf16.msra.mxu0 0
      %1170 = vmatprep.subr.bf16.mxu0 0
      %1171 = vmatpush1.bf16.msra.mxu0 0
      %1172 = vmatprep.subr.bf16.mxu0 0
      %1173 = vmatpush1.bf16.msra.mxu0 0
      %1174 = vmatprep.mubr.bf16.mxu0 %v1140
      %1175 = vmatmul.mubr.bf16.gmra.mrb[0].mxu0 %v1070
      %v1176 = vpop.f32.mrb[0].mxu0
      %v1177 = vadd.f32 0.0, %v1176
      %v1178 = vpop.f32.mrb[0].mxu0
      %v1179 = vpop.f32.mrb[0].mxu0
      %v1180 = vadd.f32 0.0, %v1179
      %v1181 = vpop.f32.mrb[0].mxu0
      %1182 = vdwg.mxu0
      %v1201 = vunpack.c.l.b16 %v1022
      %v1202 = vunpack.c.l.b16 %v1023
      %v1203 = vunpack.c.l.b16 %v1024
      %v1204 = vunpack.c.l.b16 %v1025
      %v1205 = vunpack.c.l.b16 %v1026
      %v1206 = vunpack.c.l.b16 %v1027
      %v1207 = vunpack.c.l.b16 %v1028
      %v1208 = vunpack.c.l.b16 %v1029
      %v1209 = vunpack.c.l.b16 %v1030
      %v1210 = vunpack.c.l.b16 %v1031
      %v1211 = vunpack.c.l.b16 %v1032
      %v1212 = vunpack.c.l.b16 %v1033
      %v1213 = vunpack.c.l.b16 %v1034
      %v1214 = vunpack.c.l.b16 %v1035
      %v1215 = vunpack.c.l.b16 %v1036
      %v1216 = vunpack.c.l.b16 %v1037
      %v1217 = vunpack.c.l.b16 %v1038
      %v1218 = vunpack.c.l.b16 %v1039
      %v1219 = vpack.c.b16 %v1202, %v1201
      %v1220 = vpack.c.b16 %v1204, %v1203
      %v1221 = vpack.c.b16 %v1206, %v1205
      %v1222 = vpack.c.b16 %v1208, %v1207
      %v1223 = vpack.c.b16 %v1210, %v1209
      %v1224 = vpack.c.b16 %v1212, %v1211
      %v1225 = vpack.c.b16 %v1214, %v1213
      %v1226 = vpack.c.b16 %v1216, %v1215
      %v1227 = vpack.c.b16 %v1218, %v1217
      %v1237 = vsel %vm1138, %v1019, 0
      %1239 = vmatprep.subr.bf16.mxu0 0
      %1240 = vmatpush1.bf16.msra.mxu0 %v1219
      %1241 = vmatprep.subr.bf16.mxu0 0
      %1242 = vmatpush1.bf16.msra.mxu0 %v1220
      %1243 = vmatprep.subr.bf16.mxu0 0
      %1244 = vmatpush1.bf16.msra.mxu0 %v1221
      %1245 = vmatprep.subr.bf16.mxu0 0
      %1246 = vmatpush1.bf16.msra.mxu0 %v1222
      %1247 = vmatprep.subr.bf16.mxu0 0
      %1248 = vmatpush1.bf16.msra.mxu0 %v1223
      %1249 = vmatprep.subr.bf16.mxu0 0
      %1250 = vmatpush1.bf16.msra.mxu0 %v1224
      %1251 = vmatprep.subr.bf16.mxu0 0
      %1252 = vmatpush1.bf16.msra.mxu0 %v1225
      %1253 = vmatprep.subr.bf16.mxu0 0
      %1254 = vmatpush1.bf16.msra.mxu0 %v1226
      %1255 = vmatprep.subr.bf16.mxu0 0
      %1256 = vmatpush1.bf16.msra.mxu0 %v1227
      %1257 = vmatprep.subr.bf16.mxu0 0
      %1258 = vmatpush1.bf16.msra.mxu0 0
      %1259 = vmatprep.subr.bf16.mxu0 0
      %1260 = vmatpush1.bf16.msra.mxu0 0
      %1261 = vmatprep.subr.bf16.mxu0 0
      %1262 = vmatpush1.bf16.msra.mxu0 0
      %1263 = vmatprep.subr.bf16.mxu0 0
      %1264 = vmatpush1.bf16.msra.mxu0 0
      %1265 = vmatprep.subr.bf16.mxu0 0
      %1266 = vmatpush1.bf16.msra.mxu0 0
      %1267 = vmatprep.subr.bf16.mxu0 0
      %1268 = vmatpush1.bf16.msra.mxu0 0
      %1269 = vmatprep.subr.bf16.mxu0 0
      %1270 = vmatpush1.bf16.msra.mxu0 0
      %1271 = vmatprep.mubr.bf16.mxu0 %v1237
      %1272 = vmatmul.mubr.bf16.gmra.mrb[0].mxu0 %v1018
      %v1273 = vpop.f32.mrb[0].mxu0
      %v1274 = vadd.f32 %v1177, %v1273
      %v1275 = vpop.f32.mrb[0].mxu0
      %v1276 = vpop.f32.mrb[0].mxu0
      %v1277 = vadd.f32 %v1180, %v1276
      %v1278 = vpop.f32.mrb[0].mxu0
      %1279 = vdwg.mxu0
      %s1280 = scalar_lea.vmem %s3, 144
      %v1281 = vld [vmem:[%s1280] sm:$0xf]
      %v1282 = vld [vmem:[%s1280 + $0x4] sm:$0xf]
      %v1283 = vld [vmem:[%s1280 + $0x8] sm:$0xf]
      %v1284 = vld [vmem:[%s1280 + $0xc] sm:$0xf]
      %v1285 = vld [vmem:[%s1280 + $0x10] sm:$0xf]
      %v1286 = vld [vmem:[%s1280 + $0x14] sm:$0xf]
      %v1287 = vld [vmem:[%s1280 + $0x18] sm:$0xf]
      %v1288 = vld [vmem:[%s1280 + $0x1c] sm:$0xf]
      %v1289 = vld [vmem:[%s1280 + $0x20] sm:$0xf]
      %v1290 = vld [vmem:[%s1280 + $0x24] sm:$0xf]
      %v1291 = vld [vmem:[%s1280 + $0x28] sm:$0xf]
      %v1292 = vld [vmem:[%s1280 + $0x2c] sm:$0xf]
      %v1293 = vld [vmem:[%s1280 + $0x30] sm:$0xf]
      %v1294 = vld [vmem:[%s1280 + $0x34] sm:$0xf]
      %v1295 = vld [vmem:[%s1280 + $0x38] sm:$0xf]
      %v1296 = vld [vmem:[%s1280 + $0x3c] sm:$0xf]
      %v1297 = vld [vmem:[%s1280 + $0x40] sm:$0xf]
      %v1298 = vld [vmem:[%s1280 + $0x44] sm:$0xf]
      %v1303 = vrot.slane %v1018, 1
      %v1304 = vrot.slane %v1020, 1
      %v1305 = vsel %vm780, %v1303, %v1304
      %v1306 = vrot.slane %v1019, 1
      %v1307 = vrot.slane %v1021, 1
      %v1308 = vsel %vm780, %v1306, %v1307
      %v1328 = vunpack.c.l.b16 %v1281
      %v1329 = vunpack.c.l.b16 %v1282
      %v1330 = vunpack.c.l.b16 %v1283
      %v1331 = vunpack.c.l.b16 %v1284
      %v1332 = vunpack.c.l.b16 %v1285
      %v1333 = vunpack.c.l.b16 %v1286
      %v1334 = vunpack.c.l.b16 %v1287
      %v1335 = vunpack.c.l.b16 %v1288
      %v1336 = vunpack.c.l.b16 %v1289
      %v1337 = vunpack.c.l.b16 %v1290
      %v1338 = vunpack.c.l.b16 %v1291
      %v1339 = vunpack.c.l.b16 %v1292
      %v1340 = vunpack.c.l.b16 %v1293
      %v1341 = vunpack.c.l.b16 %v1294
      %v1342 = vunpack.c.l.b16 %v1295
      %v1343 = vunpack.c.l.b16 %v1296
      %v1344 = vunpack.c.l.b16 %v1297
      %v1345 = vunpack.c.l.b16 %v1298
      %v1346 = vpack.c.b16 %v1329, %v1328
      %v1347 = vpack.c.b16 %v1331, %v1330
      %v1348 = vpack.c.b16 %v1333, %v1332
      %v1349 = vpack.c.b16 %v1335, %v1334
      %v1350 = vpack.c.b16 %v1337, %v1336
      %v1351 = vpack.c.b16 %v1339, %v1338
      %v1352 = vpack.c.b16 %v1341, %v1340
      %v1353 = vpack.c.b16 %v1343, %v1342
      %v1354 = vpack.c.b16 %v1345, %v1344
      %v1365 = vsel %vm1138, %v1308, 0
      %1367 = vmatprep.subr.bf16.mxu0 0
      %1368 = vmatpush1.bf16.msra.mxu0 %v1346
      %1369 = vmatprep.subr.bf16.mxu0 0
      %1370 = vmatpush1.bf16.msra.mxu0 %v1347
      %1371 = vmatprep.subr.bf16.mxu0 0
      %1372 = vmatpush1.bf16.msra.mxu0 %v1348
      %1373 = vmatprep.subr.bf16.mxu0 0
      %1374 = vmatpush1.bf16.msra.mxu0 %v1349
      %1375 = vmatprep.subr.bf16.mxu0 0
      %1376 = vmatpush1.bf16.msra.mxu0 %v1350
      %1377 = vmatprep.subr.bf16.mxu0 0
      %1378 = vmatpush1.bf16.msra.mxu0 %v1351
      %1379 = vmatprep.subr.bf16.mxu0 0
      %1380 = vmatpush1.bf16.msra.mxu0 %v1352
      %1381 = vmatprep.subr.bf16.mxu0 0
      %1382 = vmatpush1.bf16.msra.mxu0 %v1353
      %1383 = vmatprep.subr.bf16.mxu0 0
      %1384 = vmatpush1.bf16.msra.mxu0 %v1354
      %1385 = vmatprep.subr.bf16.mxu0 0
      %1386 = vmatpush1.bf16.msra.mxu0 0
      %1387 = vmatprep.subr.bf16.mxu0 0
      %1388 = vmatpush1.bf16.msra.mxu0 0
      %1389 = vmatprep.subr.bf16.mxu0 0
      %1390 = vmatpush1.bf16.msra.mxu0 0
      %1391 = vmatprep.subr.bf16.mxu0 0
      %1392 = vmatpush1.bf16.msra.mxu0 0
      %1393 = vmatprep.subr.bf16.mxu0 0
      %1394 = vmatpush1.bf16.msra.mxu0 0
      %1395 = vmatprep.subr.bf16.mxu0 0
      %1396 = vmatpush1.bf16.msra.mxu0 0
      %1397 = vmatprep.subr.bf16.mxu0 0
      %1398 = vmatpush1.bf16.msra.mxu0 0
      %1399 = vmatprep.mubr.bf16.mxu0 %v1365
      %1400 = vmatmul.mubr.bf16.gmra.mrb[0].mxu0 %v1305
      %v1401 = vpop.f32.mrb[0].mxu0
      %v1402 = vadd.f32 0.0, %v1401
      %v1403 = vpop.f32.mrb[0].mxu0
      %v1404 = vpop.f32.mrb[0].mxu0
      %v1405 = vadd.f32 0.0, %v1404
      %v1406 = vpop.f32.mrb[0].mxu0
      %1407 = vdwg.mxu0
      %v1408 = vadd.f32 %v1274, %v1402
      %v1409 = vadd.f32 %v1277, %v1405
      %v1410 = vld [vmem:[%s6] sm:$0x1]
      %v1412 = vlaneseq
      %v1413 = vshrl.u32 %v1412, 7
      %v1414 = vsub.s32 0, %v1413
      %v1415 = vrot.slane %v1410, %v1414
      %v1417 = vmul.f32 %v1408, %v1415
      %v1418 = vmul.f32 %v1409, %v1415
      %v1419 = vld [vmem:[%s7] sm:$0x1]
      %v1421 = vlaneseq
      %v1422 = vshrl.u32 %v1421, 7
      %v1423 = vsub.s32 0, %v1422
      %v1424 = vrot.slane %v1419, %v1423
      %v1426 = vadd.f32 %v1417, %v1424
      %v1427 = vadd.f32 %v1418, %v1424
      %v1428 = vld [vmem:[%s347] sm:$0xff]
      %v1429 = vld [vmem:[%s347 + $0x8] sm:$0xff]
      %v1430 = vadd.f32 %v1426, %v1428
      %v1431 = vadd.f32 %v1427, %v1429
      %v1432 = vpack.c.bf16 %v1431, %v1430
      %v1434 = vunpack.c.l.b16 %v1432
      %v1435 = vunpack.c.h.b16 %v1432
      %v1436 = vpack.c.b16 %v1434, %v1434
      %v1437 = vpack.c.b16 %v1435, %v1435
      %1440 = vst [vmem:[%s352] sm:$0xf] %v1436
      %1441 = vst [vmem:[%s352 + $0x4] sm:$0xf] %v1437
      %p1442 = scmp.lt.s32.totalorder %s20, 1
      %s1443 = scalar_select %p1442, %s20, 1
      %s1444 = smul.addr %s1443, 2
      %s1445 = smul.addr %s1444, 4
      %s1446 = scalar_lea.vmem %s9, %s1445
      // Predicated region
      $region57: #{basic_residual_block.1} parent=55 // pred_check
        %p1447 = pneg %p237
      $region58: #{basic_residual_block.1} parent=55 // pred_check_branch
        %1449 = sbr.rel (%p1447) target = $region60
      $region59: #{basic_residual_block.1} parent=55 // pred_region
        _
      $region60: #{basic_residual_block.1} parent=55 // pred_fallthru
        _
    $region56: #{basic_residual_block.1} parent=5 // pred_fallthru
      _
    %p1450 = scmp.le.s32.totalorder 2, %s15
    // Predicated region
    $region61: #{basic_residual_block.1} parent=5 // pred_check
      %p1451 = pneg %p1450
    $region62: #{basic_residual_block.1} parent=5 // pred_check_branch
      %1453 = sbr.rel (%p1451) target = $region64
    $region63: #{basic_residual_block.1} parent=5 // pred_region
      %s1454 = ssub.s32 %s15, 2
      // Predicated region
      $region65: #{basic_residual_block.1} parent=63 // pred_check
        %p1455 = pneg %p243
      $region66: #{basic_residual_block.1} parent=63 // pred_check_branch
        %1457 = sbr.rel (%p1455) target = $region68
      $region67: #{basic_residual_block.1} parent=63 // pred_region
        %p1458 = scmp.lt.s32.totalorder %s21, 1
        %s1459 = scalar_select %p1458, %s21, 1
        %s1460 = smul.addr %s1459, 2
        %s1461 = smul.addr %s1460, 4
        %s1462 = scalar_lea.vmem %s9, %s1461
      $region68: #{basic_residual_block.1} parent=63 // pred_fallthru
        _
    $region64: #{basic_residual_block.1} parent=5 // pred_fallthru
      _
  $region6: #{basic_residual_block.1} parent=0 // loop_footer
    %s19 = sadd.s32 1, %s15
  $region7: #{basic_residual_block.1} parent=0 // loop_footer_branch
    %14 = sbr.rel target = $region3
  $region8: #{basic_residual_block.1} parent=0 // loop_exit
    _

</llo_original>
